<compile_context>
chip_gen: v7x
topology: tpu7x:2x2x1
jax: 0.10.0
libtpu: 0.0.40
codegen_flags: <defaults>
</compile_context>

<pallas_src>
import functools

import jax
import jax.numpy as jnp
from jax.experimental import pallas as pl
from jax.experimental.pallas import tpu as pltpu


def _group_feature_kernel(xyz_q_ref, kaug_ref, keys_ref, out_ref, *, group_size):
    """One grid step = (batch b, query tile q).

    xyz_q_ref: (1, TQ, 3)        query points for this tile
    kaug_ref:  (1, N, 5)  f32    precomputed [-2*xyz, 1, |xyz|^2] key rows
    keys_ref:  (1, N, C+3)       precomputed [feat | xyz] gather source
    out_ref:   (1, TQ, K*(C+3))  lane-dense slab: per k, [feat | centered xyz]
    """
    tq = xyz_q_ref.shape[1]
    n = kaug_ref.shape[1]
    cp3 = keys_ref.shape[2]
    c = cp3 - 3

    xyz_q = xyz_q_ref[0].astype(jnp.float32)                           # (TQ, 3)
    k_aug = kaug_ref[0]                                                # (N, 5) f32
    keys = keys_ref[0]                                                 # (N, C+3)

    # Pairwise squared distances via ONE augmented matmul:
    #   dist[i, j] = |q_i|^2 + |k_j|^2 - 2 q_i . k_j
    q_sq = jnp.sum(xyz_q * xyz_q, axis=-1, keepdims=True)              # (TQ, 1)
    q_aug = jnp.concatenate(
        [xyz_q, q_sq, jnp.ones((tq, 1), jnp.float32)], axis=-1)        # (TQ, 5)
    dist = jax.lax.dot_general(
        q_aug, k_aug, (((1,), (1,)), ((), ())),
        precision=jax.lax.Precision.HIGHEST,
        preferred_element_type=jnp.float32)                            # (TQ, N)

    # Hoisted iotas (JAX does not CSE broadcast_in_dim inside the unrolled loop).
    col_iota = jax.lax.broadcasted_iota(jnp.int32, (tq, n), 1)         # (TQ, N)
    row_iota = jax.lax.broadcasted_iota(jnp.int32, (1, n), 1)          # (1, N)

    # --- Selection phase: K serial argmin/mask steps; record indices only. ---
    # Ties resolve to the lowest index (matches lax.top_k / torch KNN ordering;
    # neighbor 0 is the query point itself).
    idx_list = []
    for k in range(group_size):
        idx = jnp.argmin(dist, axis=-1, keepdims=True).astype(jnp.int32)   # (TQ, 1)
        idx_list.append(idx)
        if k + 1 < group_size:
            dist = jnp.where(col_iota == idx, jnp.inf, dist)

    # --- Gather phase: ONE batched one-hot MXU matmul for all K neighbors. ---
    # A 0/1 one-hot matmul is an exact gather for bf16 inputs; for f32 inputs
    # Precision.HIGHEST keeps the multi-pass decomposition exact as well.
    idx_all = jnp.concatenate(idx_list, axis=0)                        # (K*TQ, 1)
    onehot = (row_iota == idx_all).astype(keys.dtype)                  # (K*TQ, N)
    gather_prec = (jax.lax.Precision.HIGHEST if keys.dtype == jnp.float32
                   else jax.lax.Precision.DEFAULT)
    g = jnp.dot(onehot, keys, precision=gather_prec,
                preferred_element_type=jnp.float32)                    # (K*TQ, C+3)

    # Center the xyz columns and assemble one lane-dense (TQ, K*(C+3)) slab.
    center_pad = jnp.concatenate(
        [jnp.zeros((tq, c), jnp.float32), xyz_q], axis=-1)             # (TQ, C+3)
    slabs = [g[k * tq:(k + 1) * tq, :] - center_pad for k in range(group_size)]
    out_ref[0] = jnp.concatenate(slabs, axis=-1).astype(out_ref.dtype)


def _vmem_capacity_bytes():
    try:
        info = pltpu.get_tpu_info()
        return int(getattr(info, "vmem_capacity_bytes", 128 * 1024 * 1024))
    except Exception:
        return 128 * 1024 * 1024


def _round_up(x, m):
    return ((x + m - 1) // m) * m


def _estimate_tile_vmem(tq, n, c, k, in_bytes):
    """Rough per-grid-step VMEM footprint (bytes) of the kernel above."""
    cp3 = c + 3
    lanes = lambda x: _round_up(x, 128)
    blocks = 2 * (tq * lanes(3) * in_bytes            # xyz query tile (dbl-buf)
                  + n * lanes(5) * 4                  # k_aug (f32)
                  + n * lanes(cp3) * in_bytes         # keys
                  + tq * lanes(k * cp3) * in_bytes)   # output slab
    temps = (tq * n * 8                               # dist (f32) + col_iota (i32)
             + k * tq * n * in_bytes                  # batched one-hot
             + k * tq * lanes(cp3) * 4                # batched gather result (f32)
             + tq * lanes(k * cp3) * 4)               # assembled slab (f32)
    return blocks + temps


def _pick_query_tile(n, c, k, in_bytes, target, budget):
    """Largest divisor of N (preferring multiples of 128, else 8) <= target whose
    estimated footprint fits `budget`; never tiny (<64) when avoidable."""
    def divisors(step):
        return sorted({t for t in range(step, n + 1, step) if n % t == 0},
                      reverse=True)
    cands = divisors(128) or divisors(8) or [n]
    for t in cands:
        if t <= target and _estimate_tile_vmem(t, n, c, k, in_bytes) <= budget:
            return t
    small = min(cands)
    if small < 64:
        mid = [t for t in cands if 64 <= t <= 128]
        if mid:
            return min(mid)
    return small


def group_feature(xyz, feat, group_size):
    """Pallas wrapper. xyz: (B, N, 3), feat: (B, N, C) ->
    (B, N, K, 3) centered neighborhood, (B, N, K, C) neighborhood features."""
    B, N, _ = xyz.shape
    C = feat.shape[-1]
    K = group_size
    if K > N:
        raise ValueError(f"group_size={K} exceeds number of points N={N}")

    cd = jnp.result_type(xyz.dtype, feat.dtype)   # gather / output slab dtype
    in_bytes = jnp.dtype(cd).itemsize

    # Chip-aware VMEM cap and query tile (v7x: 64 MiB VMEM; v5e/v6e: 128 MiB).
    vmem_cap = _vmem_capacity_bytes()
    vmem_limit = min(64 * 1024 * 1024, int(0.62 * vmem_cap))
    tq_target = 256 if vmem_cap >= 96 * 1024 * 1024 else 128
    TQ = _pick_query_tile(N, C, K, in_bytes, tq_target, int(0.75 * vmem_limit))
    n_q_tiles = N // TQ

    # Hoisted key-side tensors (computed once, not once per query tile):
    #   keys  = [feat | xyz]          (B, N, C+3)   gather source
    #   k_aug = [-2*xyz, 1, |xyz|^2]  (B, N, 5) f32 distance-matrix RHS
    xyz32 = xyz.astype(jnp.float32)
    keys = jnp.concatenate([feat.astype(cd), xyz.astype(cd)], axis=-1)
    k_aug = jnp.concatenate(
        [-2.0 * xyz32,
         jnp.ones((B, N, 1), jnp.float32),
         jnp.sum(xyz32 * xyz32, axis=-1, keepdims=True)], axis=-1)

    kernel = functools.partial(_group_feature_kernel, group_size=K)

    # Scheduling hint for XLA around the custom call.
    flops = 2 * B * N * N * 5 + 2 * B * K * N * N * (C + 3)
    bytes_accessed = (B * N * 3 * xyz.dtype.itemsize
                      + B * N * (C + 3) * in_bytes * n_q_tiles
                      + B * N * 5 * 4 * n_q_tiles
                      + B * N * K * (C + 3) * in_bytes)
    cost = pl.CostEstimate(flops=flops, transcendentals=0,
                           bytes_accessed=bytes_accessed)

    slab = pl.pallas_call(
        kernel,
        out_shape=jax.ShapeDtypeStruct((B, N, K * (C + 3)), cd),
        grid_spec=pltpu.PrefetchScalarGridSpec(
            num_scalar_prefetch=0,
            grid=(B, n_q_tiles),   # both parallel -> megacore split on v7x
            in_specs=[
                # query tile of xyz
                pl.BlockSpec((1, TQ, 3), lambda b, q: (b, q, 0)),
                # full key-side tensors (same block for every q step)
                pl.BlockSpec((1, N, 5), lambda b, q: (b, 0, 0)),
                pl.BlockSpec((1, N, C + 3), lambda b, q: (b, 0, 0)),
            ],
            out_specs=pl.BlockSpec((1, TQ, K * (C + 3)), lambda b, q: (b, q, 0)),
        ),
        compiler_params=pltpu.CompilerParams(
            dimension_semantics=("parallel", "parallel"),
            vmem_limit_bytes=vmem_limit,
        ),
        cost_estimate=cost,
    )(xyz, k_aug, keys)

    slab = slab.reshape(B, N, K, C + 3)
    nfeat = slab[..., :C].astype(feat.dtype)
    neigh = slab[..., C:].astype(xyz.dtype)
    return neigh, nfeat


def _reference(xyz, feat, group_size):
    """Pure-JAX reference mirroring the PyTorch forward."""
    B, N, _ = xyz.shape
    sq = jnp.sum(xyz * xyz, axis=-1)
    dist = sq[:, :, None] + sq[:, None, :] - 2.0 * jnp.einsum(
        "bnd,bmd->bnm", xyz, xyz)
    idx = jax.lax.top_k(-dist, group_size)[1]                 # (B, N, K)
    b_idx = jnp.arange(B)[:, None, None]
    neigh = xyz[b_idx, idx] - xyz[:, :, None, :]              # (B, N, K, 3)
    nfeat = feat[b_idx, idx]                                  # (B, N, K, C)
    return neigh, nfeat


if __name__ == "__main__":
    key = jax.random.PRNGKey(0)
    k1, k2 = jax.random.split(key)

    B, N, C, K = 2, 16, 32, 4
    xyz = jax.random.normal(k1, (B, N, 3), dtype=jnp.float32)
    feat = jax.random.normal(k2, (B, N, C), dtype=jnp.float32)

    neigh, nfeat = group_feature(xyz, feat, K)
    jax.block_until_ready((neigh, nfeat))

    ref_neigh, ref_nfeat = _reference(xyz, feat, K)
    assert neigh.shape == (B, N, K, 3)
    assert nfeat.shape == (B, N, K, C)
    assert jnp.allclose(neigh, ref_neigh, atol=1e-4)
    assert jnp.allclose(nfeat, ref_nfeat, atol=1e-4)

    print("KERNEL_OK")
</pallas_src>

<mosaic_0001>
module attributes {stable_mosaic.version = 11 : i64} {
  func.func @_group_feature_kernel(%arg0: i32, %arg1: i32, %arg2: memref<1x16x3xf32, #tpu.memory_space<vmem>>, %arg3: memref<1x16x5xf32, #tpu.memory_space<vmem>>, %arg4: memref<1x16x35xf32, #tpu.memory_space<vmem>>, %arg5: memref<1x16x140xf32, #tpu.memory_space<vmem>>) attributes {dimension_semantics = [#tpu.dimension_semantics<parallel>, #tpu.dimension_semantics<parallel>], iteration_bounds = array<i64: 2, 1>, scalar_prefetch = 0 : i64, scratch_operands = 0 : i64, tpu.core_type = #tpu.core_type<tc>, window_params = [{transform_indices = @transform_0, window_bounds = array<i64: 1, 16, 3>}, {transform_indices = @transform_1, window_bounds = array<i64: 1, 16, 5>}, {transform_indices = @transform_2, window_bounds = array<i64: 1, 16, 35>}, {transform_indices = @transform_3, window_bounds = array<i64: 1, 16, 140>}]} {
    %c0 = arith.constant 0 : index
    %c0_0 = arith.constant 0 : index
    %c0_1 = arith.constant 0 : index
    %0 = vector.load %arg2[%c0, %c0_0, %c0_1] : memref<1x16x3xf32, #tpu.memory_space<vmem>>, vector<1x16x3xf32>
    %1 = vector.shape_cast %0 : vector<1x16x3xf32> to vector<16x3xf32>
    %c0_2 = arith.constant 0 : index
    %c0_3 = arith.constant 0 : index
    %c0_4 = arith.constant 0 : index
    %2 = vector.load %arg3[%c0_2, %c0_3, %c0_4] : memref<1x16x5xf32, #tpu.memory_space<vmem>>, vector<1x16x5xf32>
    %3 = vector.shape_cast %2 : vector<1x16x5xf32> to vector<16x5xf32>
    %c0_5 = arith.constant 0 : index
    %c0_6 = arith.constant 0 : index
    %c0_7 = arith.constant 0 : index
    %4 = vector.load %arg4[%c0_5, %c0_6, %c0_7] : memref<1x16x35xf32, #tpu.memory_space<vmem>>, vector<1x16x35xf32>
    %5 = vector.shape_cast %4 : vector<1x16x35xf32> to vector<16x35xf32>
    %6 = arith.mulf %1, %1 : vector<16x3xf32>
    %cst = arith.constant dense<0.000000e+00> : vector<16xf32>
    %7 = vector.multi_reduction <add>, %6, %cst [1] : vector<16x3xf32> to vector<16xf32>
    %8 = vector.shape_cast %7 : vector<16xf32> to vector<16x1xf32>
    %cst_8 = arith.constant 1.000000e+00 : f32
    %9 = vector.broadcast %cst_8 : f32 to vector<16x1xf32>
    %10 = tpu.concatenate %1, %8, %9 in 1 : vector<16x3xf32>, vector<16x1xf32>, vector<16x1xf32> -> vector<16x5xf32>
    %cst_9 = arith.constant dense<0.000000e+00> : vector<16x16xf32>
    %11 = tpu.matmul %10, %3, %cst_9 {dimension_numbers = #tpu.dot_dimension_numbers<[1], [1], [0], [0], [0, 0, 1, 0], [], []>, precision = #tpu.contract_precision<fp32>} : vector<16x5xf32>, vector<16x5xf32>, vector<16x16xf32> -> vector<16x16xf32>
    %12 = tpu.iota {dimensions = array<i32: 1>} : vector<16x16xi32>
    %13 = tpu.iota {dimensions = array<i32: 1>} : vector<1x16xi32>
    %14 = tpu.reduce_index %11 {axis = 1 : i32, kind = #tpu.reduction_kind<arg_min>} : vector<16x16xf32> -> vector<16xi32>
    %15 = vector.shape_cast %14 : vector<16xi32> to vector<16x1xi32>
    %16 = vector.broadcast %15 : vector<16x1xi32> to vector<16x16xi32>
    %17 = arith.cmpi eq, %12, %16 : vector<16x16xi32>
    %cst_10 = arith.constant 0x7F800000 : f32
    %18 = vector.broadcast %cst_10 : f32 to vector<16x16xf32>
    %19 = arith.select %17, %18, %11 : vector<16x16xi1>, vector<16x16xf32>
    %20 = tpu.reduce_index %19 {axis = 1 : i32, kind = #tpu.reduction_kind<arg_min>} : vector<16x16xf32> -> vector<16xi32>
    %21 = vector.shape_cast %20 : vector<16xi32> to vector<16x1xi32>
    %22 = vector.broadcast %21 : vector<16x1xi32> to vector<16x16xi32>
    %23 = arith.cmpi eq, %12, %22 : vector<16x16xi32>
    %cst_11 = arith.constant 0x7F800000 : f32
    %24 = vector.broadcast %cst_11 : f32 to vector<16x16xf32>
    %25 = arith.select %23, %24, %19 : vector<16x16xi1>, vector<16x16xf32>
    %26 = tpu.reduce_index %25 {axis = 1 : i32, kind = #tpu.reduction_kind<arg_min>} : vector<16x16xf32> -> vector<16xi32>
    %27 = vector.shape_cast %26 : vector<16xi32> to vector<16x1xi32>
    %28 = vector.broadcast %27 : vector<16x1xi32> to vector<16x16xi32>
    %29 = arith.cmpi eq, %12, %28 : vector<16x16xi32>
    %cst_12 = arith.constant 0x7F800000 : f32
    %30 = vector.broadcast %cst_12 : f32 to vector<16x16xf32>
    %31 = arith.select %29, %30, %25 : vector<16x16xi1>, vector<16x16xf32>
    %32 = tpu.reduce_index %31 {axis = 1 : i32, kind = #tpu.reduction_kind<arg_min>} : vector<16x16xf32> -> vector<16xi32>
    %33 = vector.shape_cast %32 : vector<16xi32> to vector<16x1xi32>
    %34 = tpu.concatenate %15, %21, %27, %33 in 0 : vector<16x1xi32>, vector<16x1xi32>, vector<16x1xi32>, vector<16x1xi32> -> vector<64x1xi32>
    %35 = vector.broadcast %13 : vector<1x16xi32> to vector<64x16xi32>
    %36 = vector.broadcast %34 : vector<64x1xi32> to vector<64x16xi32>
    %37 = arith.cmpi eq, %35, %36 : vector<64x16xi32>
    %38 = arith.extui %37 : vector<64x16xi1> to vector<64x16xi32>
    %39 = arith.sitofp %38 : vector<64x16xi32> to vector<64x16xf32>
    %cst_13 = arith.constant dense<0.000000e+00> : vector<64x35xf32>
    %40 = tpu.matmul %39, %5, %cst_13 {dimension_numbers = #tpu.dot_dimension_numbers<[1], [0], [0], [1], [0, 0, 1, 1], [], []>, precision = #tpu.contract_precision<fp32>} : vector<64x16xf32>, vector<16x35xf32>, vector<64x35xf32> -> vector<64x35xf32>
    %cst_14 = arith.constant 0.000000e+00 : f32
    %41 = vector.broadcast %cst_14 : f32 to vector<16x32xf32>
    %42 = tpu.concatenate %41, %1 in 1 : vector<16x32xf32>, vector<16x3xf32> -> vector<16x35xf32>
    %43 = vector.extract_strided_slice %40 {offsets = [0, 0], sizes = [16, 35], strides = [1, 1]} : vector<64x35xf32> to vector<16x35xf32>
    %44 = arith.subf %43, %42 : vector<16x35xf32>
    %45 = vector.extract_strided_slice %40 {offsets = [16, 0], sizes = [16, 35], strides = [1, 1]} : vector<64x35xf32> to vector<16x35xf32>
    %46 = arith.subf %45, %42 : vector<16x35xf32>
    %47 = vector.extract_strided_slice %40 {offsets = [32, 0], sizes = [16, 35], strides = [1, 1]} : vector<64x35xf32> to vector<16x35xf32>
    %48 = arith.subf %47, %42 : vector<16x35xf32>
    %49 = vector.extract_strided_slice %40 {offsets = [48, 0], sizes = [16, 35], strides = [1, 1]} : vector<64x35xf32> to vector<16x35xf32>
    %50 = arith.subf %49, %42 : vector<16x35xf32>
    %51 = tpu.concatenate %44, %46, %48, %50 in 1 : vector<16x35xf32>, vector<16x35xf32>, vector<16x35xf32>, vector<16x35xf32> -> vector<16x140xf32>
    %c0_15 = arith.constant 0 : index
    %c0_16 = arith.constant 0 : index
    %c0_17 = arith.constant 0 : index
    %52 = vector.load %arg5[%c0_15, %c0_16, %c0_17] : memref<1x16x140xf32, #tpu.memory_space<vmem>>, vector<1x16x140xf32>
    %53 = vector.shape_cast %52 : vector<1x16x140xf32> to vector<16x140xf32>
    %54 = vector.shape_cast %51 : vector<16x140xf32> to vector<1x16x140xf32>
    tpu.vector_store %arg5[%c0_15, %c0_16, %c0_17], %54 {strides = array<i32>} : memref<1x16x140xf32, #tpu.memory_space<vmem>>, vector<1x16x140xf32>,
    return
  }
  func.func @transform_0(%arg0: i32, %arg1: i32) -> (i32, i32, i32) {
    %c0_i32 = arith.constant 0 : i32
    %c0_i32_0 = arith.constant 0 : i32
    return %arg0, %arg1, %c0_i32 : i32, i32, i32
  }
  func.func @transform_1(%arg0: i32, %arg1: i32) -> (i32, i32, i32) {
    %c0_i32 = arith.constant 0 : i32
    %c0_i32_0 = arith.constant 0 : i32
    %c0_i32_1 = arith.constant 0 : i32
    return %arg0, %c0_i32, %c0_i32_0 : i32, i32, i32
  }
  func.func @transform_2(%arg0: i32, %arg1: i32) -> (i32, i32, i32) {
    %c0_i32 = arith.constant 0 : i32
    %c0_i32_0 = arith.constant 0 : i32
    %c0_i32_1 = arith.constant 0 : i32
    return %arg0, %c0_i32, %c0_i32_0 : i32, i32, i32
  }
  func.func @transform_3(%arg0: i32, %arg1: i32) -> (i32, i32, i32) {
    %c0_i32 = arith.constant 0 : i32
    %c0_i32_0 = arith.constant 0 : i32
    return %arg0, %arg1, %c0_i32 : i32, i32, i32
  }
}

</mosaic_0001>

<llo_original>
// kernel: tpu_custom_call.1
$region0: #{tpu_custom_call.1}
  #allocation0 [shape = 'u32[]', space=smem, size = 0x4, offset = 0x4, fixed_abs, tag = 'smem constant byte address 0x4 - core index']
  #allocation1 [shape = 'u32[144,128]{1,0:T(1,128)}', space=vmem, size = 0x12000, scoped, tag = 'internal scratch']
  %s0 = inlined_call_operand.hbm [shape: f32[2,16,3], index: 0, kind: input, shape index: {}]
  %s1 = inlined_call_operand.hbm [shape: f32[2,16,5], index: 1, kind: input, shape index: {}]
  %s2 = inlined_call_operand.hbm [shape: f32[2,16,35], index: 2, kind: input, shape index: {}]
  %s3 = inlined_call_operand.hbm [shape: f32[2,16,140], index: 3, kind: output, shape index: {}]
  %s4 = sld [smem:[#allocation0]]
  $region57: #{tpu_custom_call.1} parent=0
    _
  %s6 = ssub.s32 1, %s4
  %s7 = scalar_select 0, %s6, %s4
  $region1: #{tpu_custom_call.1} parent=0
    #allocation2 [shape = 'u8[16384]{0}', space=vmem, size = 0x4000, scoped, tag = 'input window, operand 0']
    #allocation3 [shape = 's32[2]{0}', space=sflag, size = 0x8, scoped, tag = 'scoped memory for tpu_custom_call.1']
    #allocation4 [shape = 's32[2]{0}', space=sflag, size = 0x8, scoped, tag = 'scoped memory for tpu_custom_call.1']
    #allocation5 [shape = 'u8[16384]{0}', space=vmem, size = 0x4000, scoped, tag = 'input window, operand 1']
    #allocation6 [shape = 's32[2]{0}', space=sflag, size = 0x8, scoped, tag = 'scoped memory for tpu_custom_call.1']
    #allocation7 [shape = 'u8[16384]{0}', space=vmem, size = 0x4000, scoped, tag = 'input window, operand 2']
    #allocation8 [shape = 'u8[32768]{0}', space=vmem, size = 0x8000, scoped, tag = 'output window, operand 0']
    %8 = vsyncpa [#allocation3], 0
    %s9 = scalar_lea.sflag [#allocation3], 1
    %10 = vsyncpa %s9, 0
    %11 = vsyncpa [#allocation6], 0
    %s12 = scalar_lea.sflag [#allocation6], 1
    %13 = vsyncpa %s12, 0
    %14 = vsyncpa [#allocation4], 0
    %s15 = scalar_lea.sflag [#allocation4], 1
    %16 = vsyncpa %s15, 0
    loop: start=0, step=1, limit=4
    $region2: #{tpu_custom_call.1} parent=1 // loop_pre_header
      _
    $region3: #{tpu_custom_call.1} parent=1 // loop_header
      %s18 = sphi 0, %s22
      %p19 = scmp.ge.s32.totalorder %s18, 4
      %s25 = sphi 0, %s37
      %s26 = sphi 0, %s33
      %s27 = sphi 0, %s25
      %s28 = sphi 0, %s26
      %s29 = sphi 0, %s27
      %s30 = sphi 0, %s28
      %s42 = sphi 0, %s44
      %s45 = sphi 0, %s42
      %s46 = sphi 0, %s45
      %s62 = sphi 0, %s46
      %s68 = sphi 0, %s70
      %s71 = sphi 0, %s68
      %s72 = sphi 0, %s71
      %s88 = sphi 0, %s72
      %s94 = sphi 0, %s96
      %s97 = sphi 0, %s94
      %s98 = sphi 0, %s97
      %s114 = sphi 0, %s98
      %s122 = sphi 0, %s124
      %s125 = sphi 0, %s122
      %s126 = sphi 0, %s125
      %s142 = sphi 0, %s126
    $region4: #{tpu_custom_call.1} parent=1 // loop_header_branch
      %21 = sbr.rel (%p19) target = $region8
    $region5: #{tpu_custom_call.1} parent=1 // loop_body
      %s23 = ssub.s32 %s18, 1
      %s24 = ssub.s32 %s18, 2
      %s31 = sadd.s32 1, %s26
      %p32 = scmp.ge.s32.totalorder %s31, 1
      %s33 = scalar_select %p32, 0, %s31
      %s34 = sadd.s32 1, %s25
      %s35 = scalar_select %p32, %s34, %s25
      %p36 = scmp.ge.s32.totalorder %s35, 2
      %s37 = scalar_select %p36, 0, %s35
      %s38 = ssub.s32 %s25, %s37
      %s39 = ssub.s32 %s26, %s33
      %s40 = sor.u32 %s38, %s39
      %p41 = scmp.eq.s32.totalorder %s40, 0
      %s43 = sadd.s32 %s42, 1
      %s44 = scalar_select %p41, %s42, %s43
      %p47 = pneg %p41
      %p48 = scmp.eq.s32.totalorder %s18, 1
      %p49 = por %p47, %p48
      %p50 = scmp.ne.s32.totalorder %s42, %s45
      %p51 = scmp.eq.s32.totalorder %s18, 0
      %p52 = por %p50, %p51
      %p53 = scmp.ne.s32.totalorder %s42, %s45
      %p54 = scmp.eq.s32.totalorder %s23, 1
      %p55 = por %p53, %p54
      %p56 = scmp.ne.s32.totalorder %s45, %s46
      %p57 = scmp.eq.s32.totalorder %s23, 0
      %p58 = por %p56, %p57
      %p59 = scmp.ne.s32.totalorder %s45, %s46
      %p60 = scmp.eq.s32.totalorder %s24, 1
      %p61 = por %p59, %p60
      %p63 = scmp.ne.s32.totalorder %s46, %s62
      %p64 = scmp.eq.s32.totalorder %s24, 0
      %p65 = por %p63, %p64
      %s66 = ssub.s32 %s25, %s37
      %p67 = scmp.eq.s32.totalorder %s66, 0
      %s69 = sadd.s32 %s68, 1
      %s70 = scalar_select %p67, %s68, %s69
      %p73 = pneg %p67
      %p74 = scmp.eq.s32.totalorder %s18, 1
      %p75 = por %p73, %p74
      %p76 = scmp.ne.s32.totalorder %s68, %s71
      %p77 = scmp.eq.s32.totalorder %s18, 0
      %p78 = por %p76, %p77
      %p79 = scmp.ne.s32.totalorder %s68, %s71
      %p80 = scmp.eq.s32.totalorder %s23, 1
      %p81 = por %p79, %p80
      %p82 = scmp.ne.s32.totalorder %s71, %s72
      %p83 = scmp.eq.s32.totalorder %s23, 0
      %p84 = por %p82, %p83
      %p85 = scmp.ne.s32.totalorder %s71, %s72
      %p86 = scmp.eq.s32.totalorder %s24, 1
      %p87 = por %p85, %p86
      %p89 = scmp.ne.s32.totalorder %s72, %s88
      %p90 = scmp.eq.s32.totalorder %s24, 0
      %p91 = por %p89, %p90
      %s92 = ssub.s32 %s25, %s37
      %p93 = scmp.eq.s32.totalorder %s92, 0
      %s95 = sadd.s32 %s94, 1
      %s96 = scalar_select %p93, %s94, %s95
      %p99 = pneg %p93
      %p100 = scmp.eq.s32.totalorder %s18, 1
      %p101 = por %p99, %p100
      %p102 = scmp.ne.s32.totalorder %s94, %s97
      %p103 = scmp.eq.s32.totalorder %s18, 0
      %p104 = por %p102, %p103
      %p105 = scmp.ne.s32.totalorder %s94, %s97
      %p106 = scmp.eq.s32.totalorder %s23, 1
      %p107 = por %p105, %p106
      %p108 = scmp.ne.s32.totalorder %s97, %s98
      %p109 = scmp.eq.s32.totalorder %s23, 0
      %p110 = por %p108, %p109
      %p111 = scmp.ne.s32.totalorder %s97, %s98
      %p112 = scmp.eq.s32.totalorder %s24, 1
      %p113 = por %p111, %p112
      %p115 = scmp.ne.s32.totalorder %s98, %s114
      %p116 = scmp.eq.s32.totalorder %s24, 0
      %p117 = por %p115, %p116
      %s118 = ssub.s32 %s25, %s37
      %s119 = ssub.s32 %s26, %s33
      %s120 = sor.u32 %s118, %s119
      %p121 = scmp.eq.s32.totalorder %s120, 0
      %s123 = sadd.s32 %s122, 1
      %s124 = scalar_select %p121, %s122, %s123
      %p127 = pneg %p121
      %p128 = scmp.eq.s32.totalorder %s18, 1
      %p129 = por %p127, %p128
      %p130 = scmp.ne.s32.totalorder %s122, %s125
      %p131 = scmp.eq.s32.totalorder %s18, 0
      %p132 = por %p130, %p131
      %p133 = scmp.ne.s32.totalorder %s122, %s125
      %p134 = scmp.eq.s32.totalorder %s23, 1
      %p135 = por %p133, %p134
      %p136 = scmp.ne.s32.totalorder %s125, %s126
      %p137 = scmp.eq.s32.totalorder %s23, 0
      %p138 = por %p136, %p137
      %p139 = scmp.ne.s32.totalorder %s125, %s126
      %p140 = scmp.eq.s32.totalorder %s24, 1
      %p141 = por %p139, %p140
      %p143 = scmp.ne.s32.totalorder %s126, %s142
      %p144 = scmp.eq.s32.totalorder %s24, 0
      %p145 = por %p143, %p144
      %p146 = scmp.le.s32.totalorder 1, %s18
      %p147 = scmp.lt.s32.totalorder %s18, 3
      %p148 = pnand %p146, %p147
      %p149 = pneg %p148
      // Predicated region
      $region9: #{tpu_custom_call.1} parent=5 // pred_check
        _
      $region10: #{tpu_custom_call.1} parent=5 // pred_check_branch
        %151 = sbr.rel (%p148) target = $region12
      $region11: #{tpu_custom_call.1} parent=5 // pred_region
        %s152 = ssub.s32 %s18, 1
      $region12: #{tpu_custom_call.1} parent=5 // pred_fallthru
        _
      %p153 = scmp.lt.s32.totalorder %s18, 2
      // Predicated region
      $region13: #{tpu_custom_call.1} parent=5 // pred_check
        %p154 = pneg %p153
      $region14: #{tpu_custom_call.1} parent=5 // pred_check_branch
        %156 = sbr.rel (%p154) target = $region16
      $region15: #{tpu_custom_call.1} parent=5 // pred_region
        // Predicated region
        $region17: #{tpu_custom_call.1} parent=15 // pred_check
          %p157 = pneg %p52
        $region18: #{tpu_custom_call.1} parent=15 // pred_check_branch
          %159 = sbr.rel (%p157) target = $region20
        $region19: #{tpu_custom_call.1} parent=15 // pred_region
          %s160 = sand.u32 %s42, 1
          %s161 = scalar_lea.sflag [#allocation3], %s160
          %s162 = sand.u32 %s42, 1
          %s163 = smul.addr %s162, 16
          %s164 = scalar_lea.vmem [#allocation2], %s163
          %s165 = smul.u32 2, %s26
          %s167 = ssub.s32 256, 256
          %168 = vsyncadd %s161, %s167
          %s169 = smul.addr %s25, 2
          %s170 = sadd.s32 %s165, %s169
          %s171 = smul.addr %s170, 128
          %s172 = scalar_lea.hbm %s0, %s171
          %s173 = sshll.u32 %s164, 4
          %s174 = int_to_ptr.vmem [resolvable:$true] %s173
          %179 = dma.hbm_to_vmem [thread:$0]  %s172, 256, %s174, %s161, 128, 128, 8
        $region20: #{tpu_custom_call.1} parent=15 // pred_fallthru
          _
        // Predicated region
        $region21: #{tpu_custom_call.1} parent=15 // pred_check
          %p180 = pneg %p78
        $region22: #{tpu_custom_call.1} parent=15 // pred_check_branch
          %182 = sbr.rel (%p180) target = $region24
        $region23: #{tpu_custom_call.1} parent=15 // pred_region
          %s183 = sand.u32 %s18, 1
          %s184 = scalar_lea.sflag [#allocation6], %s183
          %s185 = sand.u32 %s68, 1
          %s186 = smul.addr %s185, 16
          %s187 = scalar_lea.vmem [#allocation5], %s186
          %s189 = ssub.s32 256, 256
          %190 = vsyncadd %s184, %s189
          %s191 = smul.addr %s25, 2
          %s192 = smul.addr %s191, 128
          %s193 = scalar_lea.hbm %s1, %s192
          %s194 = sshll.u32 %s187, 4
          %s195 = int_to_ptr.vmem [resolvable:$true] %s194
          %200 = dma.hbm_to_vmem [thread:$0]  %s193, 256, %s195, %s184, 128, 128, 8
        $region24: #{tpu_custom_call.1} parent=15 // pred_fallthru
          _
        // Predicated region
        $region25: #{tpu_custom_call.1} parent=15 // pred_check
          %p201 = pneg %p104
        $region26: #{tpu_custom_call.1} parent=15 // pred_check_branch
          %203 = sbr.rel (%p201) target = $region28
        $region27: #{tpu_custom_call.1} parent=15 // pred_region
          %s204 = sand.u32 %s18, 1
          %s205 = scalar_lea.sflag [#allocation6], %s204
          %s206 = sand.u32 %s94, 1
          %s207 = smul.addr %s206, 16
          %s208 = scalar_lea.vmem [#allocation7], %s207
          %s210 = ssub.s32 256, 256
          %211 = vsyncadd %s205, %s210
          %s212 = smul.addr %s25, 2
          %s213 = smul.addr %s212, 128
          %s214 = scalar_lea.hbm %s2, %s213
          %s215 = sshll.u32 %s208, 4
          %s216 = int_to_ptr.vmem [resolvable:$true] %s215
          %221 = dma.hbm_to_vmem [thread:$0]  %s214, 256, %s216, %s205, 128, 128, 8
        $region28: #{tpu_custom_call.1} parent=15 // pred_fallthru
          _
      $region16: #{tpu_custom_call.1} parent=5 // pred_fallthru
        _
      %p222 = scmp.le.s32.totalorder 1, %s18
      %p223 = scmp.lt.s32.totalorder %s18, 3
      %p224 = pnand %p222, %p223
      %p225 = pneg %p224
      // Predicated region
      $region29: #{tpu_custom_call.1} parent=5 // pred_check
        _
      $region30: #{tpu_custom_call.1} parent=5 // pred_check_branch
        %227 = sbr.rel (%p224) target = $region32
      $region31: #{tpu_custom_call.1} parent=5 // pred_region
        %s228 = ssub.s32 %s18, 1
        %s229 = sand.u32 %s45, 1
        %s230 = scalar_lea.sflag [#allocation3], %s229
        %s231 = sand.u32 %s45, 1
        %s232 = smul.addr %s231, 16
        %s233 = scalar_lea.vmem [#allocation2], %s232
        // Predicated region
        $region33: #{tpu_custom_call.1} parent=31 // pred_check
          %p234 = pneg %p58
        $region34: #{tpu_custom_call.1} parent=31 // pred_check_branch
          %236 = sbr.rel (%p234) target = $region36
        $region35: #{tpu_custom_call.1} parent=31 // pred_region
          %237 = dma.done %s230, 256
        $region36: #{tpu_custom_call.1} parent=31 // pred_fallthru
          _
        %s238 = sand.u32 %s23, 1
        %s239 = scalar_lea.sflag [#allocation6], %s238
        %s240 = sand.u32 %s71, 1
        %s241 = smul.addr %s240, 16
        %s242 = scalar_lea.vmem [#allocation5], %s241
        // Predicated region
        $region37: #{tpu_custom_call.1} parent=31 // pred_check
          %p243 = pneg %p84
        $region38: #{tpu_custom_call.1} parent=31 // pred_check_branch
          %245 = sbr.rel (%p243) target = $region40
        $region39: #{tpu_custom_call.1} parent=31 // pred_region
          %246 = dma.done %s239, 256
        $region40: #{tpu_custom_call.1} parent=31 // pred_fallthru
          _
        %s247 = sand.u32 %s23, 1
        %s248 = scalar_lea.sflag [#allocation6], %s247
        %s249 = sand.u32 %s97, 1
        %s250 = smul.addr %s249, 16
        %s251 = scalar_lea.vmem [#allocation7], %s250
        // Predicated region
        $region41: #{tpu_custom_call.1} parent=31 // pred_check
          %p252 = pneg %p110
        $region42: #{tpu_custom_call.1} parent=31 // pred_check_branch
          %254 = sbr.rel (%p252) target = $region44
        $region43: #{tpu_custom_call.1} parent=31 // pred_region
          %255 = dma.done %s248, 256
        $region44: #{tpu_custom_call.1} parent=31 // pred_fallthru
          _
        %s256 = sand.u32 %s45, 1
        %s257 = scalar_lea.sflag [#allocation3], %s256
        %s258 = sand.u32 %s45, 1
        %s259 = smul.addr %s258, 16
        %s260 = scalar_lea.vmem [#allocation2], %s259
        %p261 = pneg %p58
        %p262 = pneg %p55
        %s263 = sand.u32 %s23, 1
        %s264 = scalar_lea.sflag [#allocation6], %s263
        %s265 = sand.u32 %s71, 1
        %s266 = smul.addr %s265, 16
        %s267 = scalar_lea.vmem [#allocation5], %s266
        %p268 = pneg %p84
        %p269 = pneg %p81
        %s270 = sand.u32 %s23, 1
        %s271 = scalar_lea.sflag [#allocation6], %s270
        %s272 = sand.u32 %s97, 1
        %s273 = smul.addr %s272, 16
        %s274 = scalar_lea.vmem [#allocation7], %s273
        %p275 = pneg %p110
        %p276 = pneg %p107
        %p277 = pneg %p138
        %p278 = pneg %p135
        %s279 = sand.u32 %s125, 1
        %s280 = scalar_lea.sflag [#allocation4], %s279
        %s281 = sand.u32 %s125, 1
        %s282 = smul.addr %s281, 32
        %s283 = scalar_lea.vmem [#allocation8], %s282
        %s284 = smul.u32 2, %s28
        %s285 = smul.u32 2, %s28
        %v286 = vld [vmem:[%s233] sm:$0xff]
        %v287 = vld [vmem:[%s233 + $0x8] sm:$0xff]
        %v288 = vld [vmem:[%s242] sm:$0xff]
        %v289 = vld [vmem:[%s242 + $0x8] sm:$0xff]
        %v290 = vld [vmem:[%s251] sm:$0xff]
        %v291 = vld [vmem:[%s251 + $0x8] sm:$0xff]
        %v292 = vmul.f32 %v286, %v286
        %v293 = vmul.f32 %v287, %v287
        %vm294 = vcmask 23552
        %v295 = vsel %vm294, %v292, 0.0
        %296 = vadd.xlane.f32.xlu0 %v295
        %v297 = vpop.xlane.xlu0 %296
        %v298 = vsel %vm294, %v293, 0.0
        %299 = vadd.xlane.f32.xlu0 %v298
        %v300 = vpop.xlane.xlu0 %299
        %v301 = vsel %vm294, %v286, %v297
        %v302 = vsel %vm294, %v287, %v300
        %vm303 = vcmask 31744
        %v304 = vsel %vm303, %v301, 1.0
        %v305 = vsel %vm303, %v302, 1.0
        %vm306 = vcmask 39936
        %v308 = vsel %vm306, %v304, 0
        %v311 = vsel %vm306, %v305, 0
        %v314 = vsel %vm306, %v288, 0
        %v317 = vsel %vm306, %v289, 0
        %319 = vmatprep.subr.mxu0 0.0
        %v320 = vand.u32 %v314, 4294901760
        %321 = vmatpush1.xpose.msra.mxu0 %v320
        %322 = vmatprep.subr.mxu0 0.0
        %v323 = vand.u32 %v317, 4294901760
        %324 = vmatpush1.xpose.msra.mxu0 %v323
        %325 = vmatprep.subr.mxu0 0.0
        %326 = vmatpush1.xpose.msra.mxu0 0.0
        %327 = vmatprep.subr.mxu0 0.0
        %328 = vmatpush1.xpose.msra.mxu0 0.0
        %329 = vmatprep.subr.mxu0 0.0
        %330 = vmatpush1.xpose.msra.mxu0 0.0
        %331 = vmatprep.subr.mxu0 0.0
        %332 = vmatpush1.xpose.msra.mxu0 0.0
        %333 = vmatprep.subr.mxu0 0.0
        %334 = vmatpush1.xpose.msra.mxu0 0.0
        %335 = vmatprep.subr.mxu0 0.0
        %336 = vmatpush1.xpose.msra.mxu0 0.0
        %337 = vmatprep.subr.mxu0 0.0
        %338 = vmatpush1.xpose.msra.mxu0 0.0
        %339 = vmatprep.subr.mxu0 0.0
        %340 = vmatpush1.xpose.msra.mxu0 0.0
        %341 = vmatprep.subr.mxu0 0.0
        %342 = vmatpush1.xpose.msra.mxu0 0.0
        %343 = vmatprep.subr.mxu0 0.0
        %344 = vmatpush1.xpose.msra.mxu0 0.0
        %345 = vmatprep.subr.mxu0 0.0
        %346 = vmatpush1.xpose.msra.mxu0 0.0
        %347 = vmatprep.subr.mxu0 0.0
        %348 = vmatpush1.xpose.msra.mxu0 0.0
        %349 = vmatprep.subr.mxu0 0.0
        %350 = vmatpush1.xpose.msra.mxu0 0.0
        %351 = vmatprep.subr.mxu0 0.0
        %352 = vmatpush1.xpose.msra.mxu0 0.0
        %353 = vmatprep.subr.mxu0 0.0
        %354 = vmatpush1.xpose.msra.mxu0 0.0
        %355 = vmatprep.subr.mxu0 0.0
        %356 = vmatpush1.xpose.msra.mxu0 0.0
        %357 = vmatprep.subr.mxu0 0.0
        %358 = vmatpush1.xpose.msra.mxu0 0.0
        %359 = vmatprep.subr.mxu0 0.0
        %360 = vmatpush1.xpose.msra.mxu0 0.0
        %361 = vmatprep.subr.mxu0 0.0
        %362 = vmatpush1.xpose.msra.mxu0 0.0
        %363 = vmatprep.subr.mxu0 0.0
        %364 = vmatpush1.xpose.msra.mxu0 0.0
        %365 = vmatprep.subr.mxu0 0.0
        %366 = vmatpush1.xpose.msra.mxu0 0.0
        %367 = vmatprep.subr.mxu0 0.0
        %368 = vmatpush1.xpose.msra.mxu0 0.0
        %369 = vmatprep.subr.mxu0 0.0
        %370 = vmatpush1.xpose.msra.mxu0 0.0
        %371 = vmatprep.subr.mxu0 0.0
        %372 = vmatpush1.xpose.msra.mxu0 0.0
        %373 = vmatprep.subr.mxu0 0.0
        %374 = vmatpush1.xpose.msra.mxu0 0.0
        %375 = vmatprep.subr.mxu0 0.0
        %376 = vmatpush1.xpose.msra.mxu0 0.0
        %377 = vmatprep.subr.mxu0 0.0
        %378 = vmatpush1.xpose.msra.mxu0 0.0
        %379 = vmatprep.subr.mxu0 0.0
        %380 = vmatpush1.xpose.msra.mxu0 0.0
        %381 = vmatprep.subr.mxu0 0.0
        %382 = vmatpush1.xpose.msra.mxu0 0.0
        %383 = vmatprep.subr.mxu0 0.0
        %384 = vmatpush1.xpose.msra.mxu0 0.0
        %385 = vmatprep.mubr.f32.mxu0 0.0
        %v386 = vand.u32 %v308, 4294901760
        %v387 = vsub.f32 %v308, %v386
        %v388 = vand.u32 %v387, 4294901760
        %v389 = vsub.f32 %v387, %v388
        %v390 = vand.u32 %v389, 4294901760
        %391 = vmatmul.mubr.f32.gmra.mrb[0].mxu0 %v390
        %v392 = vpop.f32.mrb[0].mxu0
        %v393 = vadd.f32 0.0, %v392
        %v394 = vpop.f32.mrb[0].mxu0
        %395 = vmatprep.mubr.f32.mxu0 0.0
        %v396 = vand.u32 %v311, 4294901760
        %v397 = vsub.f32 %v311, %v396
        %v398 = vand.u32 %v397, 4294901760
        %v399 = vsub.f32 %v397, %v398
        %v400 = vand.u32 %v399, 4294901760
        %401 = vmatmul.mubr.f32.gmra.mrb[0].mxu0 %v400
        %v402 = vpop.f32.mrb[0].mxu0
        %v403 = vadd.f32 0.0, %v402
        %v404 = vpop.f32.mrb[0].mxu0
        %405 = vdwg.mxu0
        %406 = vmatprep.subr.mxu0 0.0
        %v407 = vand.u32 %v314, 4294901760
        %v408 = vsub.f32 %v314, %v407
        %v409 = vand.u32 %v408, 4294901760
        %v410 = vsub.f32 %v408, %v409
        %v411 = vand.u32 %v410, 4294901760
        %412 = vmatpush1.xpose.msra.mxu0 %v411
        %413 = vmatprep.subr.mxu0 0.0
        %v414 = vand.u32 %v317, 4294901760
        %v415 = vsub.f32 %v317, %v414
        %v416 = vand.u32 %v415, 4294901760
        %v417 = vsub.f32 %v415, %v416
        %v418 = vand.u32 %v417, 4294901760
        %419 = vmatpush1.xpose.msra.mxu0 %v418
        %420 = vmatprep.subr.mxu0 0.0
        %421 = vmatpush1.xpose.msra.mxu0 0.0
        %422 = vmatprep.subr.mxu0 0.0
        %423 = vmatpush1.xpose.msra.mxu0 0.0
        %424 = vmatprep.subr.mxu0 0.0
        %425 = vmatpush1.xpose.msra.mxu0 0.0
        %426 = vmatprep.subr.mxu0 0.0
        %427 = vmatpush1.xpose.msra.mxu0 0.0
        %428 = vmatprep.subr.mxu0 0.0
        %429 = vmatpush1.xpose.msra.mxu0 0.0
        %430 = vmatprep.subr.mxu0 0.0
        %431 = vmatpush1.xpose.msra.mxu0 0.0
        %432 = vmatprep.subr.mxu0 0.0
        %433 = vmatpush1.xpose.msra.mxu0 0.0
        %434 = vmatprep.subr.mxu0 0.0
        %435 = vmatpush1.xpose.msra.mxu0 0.0
        %436 = vmatprep.subr.mxu0 0.0
        %437 = vmatpush1.xpose.msra.mxu0 0.0
        %438 = vmatprep.subr.mxu0 0.0
        %439 = vmatpush1.xpose.msra.mxu0 0.0
        %440 = vmatprep.subr.mxu0 0.0
        %441 = vmatpush1.xpose.msra.mxu0 0.0
        %442 = vmatprep.subr.mxu0 0.0
        %443 = vmatpush1.xpose.msra.mxu0 0.0
        %444 = vmatprep.subr.mxu0 0.0
        %445 = vmatpush1.xpose.msra.mxu0 0.0
        %446 = vmatprep.subr.mxu0 0.0
        %447 = vmatpush1.xpose.msra.mxu0 0.0
        %448 = vmatprep.subr.mxu0 0.0
        %449 = vmatpush1.xpose.msra.mxu0 0.0
        %450 = vmatprep.subr.mxu0 0.0
        %451 = vmatpush1.xpose.msra.mxu0 0.0
        %452 = vmatprep.subr.mxu0 0.0
        %453 = vmatpush1.xpose.msra.mxu0 0.0
        %454 = vmatprep.subr.mxu0 0.0
        %455 = vmatpush1.xpose.msra.mxu0 0.0
        %456 = vmatprep.subr.mxu0 0.0
        %457 = vmatpush1.xpose.msra.mxu0 0.0
        %458 = vmatprep.subr.mxu0 0.0
        %459 = vmatpush1.xpose.msra.mxu0 0.0
        %460 = vmatprep.subr.mxu0 0.0
        %461 = vmatpush1.xpose.msra.mxu0 0.0
        %462 = vmatprep.subr.mxu0 0.0
        %463 = vmatpush1.xpose.msra.mxu0 0.0
        %464 = vmatprep.subr.mxu0 0.0
        %465 = vmatpush1.xpose.msra.mxu0 0.0
        %466 = vmatprep.subr.mxu0 0.0
        %467 = vmatpush1.xpose.msra.mxu0 0.0
        %468 = vmatprep.subr.mxu0 0.0
        %469 = vmatpush1.xpose.msra.mxu0 0.0
        %470 = vmatprep.subr.mxu0 0.0
        %471 = vmatpush1.xpose.msra.mxu0 0.0
        %472 = vmatprep.subr.mxu0 0.0
        %473 = vmatpush1.xpose.msra.mxu0 0.0
        %474 = vmatprep.subr.mxu0 0.0
        %475 = vmatpush1.xpose.msra.mxu0 0.0
        %476 = vmatprep.subr.mxu0 0.0
        %477 = vmatpush1.xpose.msra.mxu0 0.0
        %478 = vmatprep.subr.mxu0 0.0
        %479 = vmatpush1.xpose.msra.mxu0 0.0
        %480 = vmatprep.mubr.f32.mxu0 0.0
        %v481 = vand.u32 %v308, 4294901760
        %482 = vmatmul.mubr.f32.gmra.mrb[0].mxu0 %v481
        %v483 = vpop.f32.mrb[0].mxu0
        %v484 = vadd.f32 %v393, %v483
        %v485 = vpop.f32.mrb[0].mxu0
        %486 = vmatprep.mubr.f32.mxu0 0.0
        %v487 = vand.u32 %v311, 4294901760
        %488 = vmatmul.mubr.f32.gmra.mrb[0].mxu0 %v487
        %v489 = vpop.f32.mrb[0].mxu0
        %v490 = vadd.f32 %v403, %v489
        %v491 = vpop.f32.mrb[0].mxu0
        %492 = vdwg.mxu0
        %493 = vmatprep.subr.mxu0 0.0
        %v494 = vand.u32 %v314, 4294901760
        %v495 = vsub.f32 %v314, %v494
        %496 = vmatpush1.xpose.msra.mxu0 %v495
        %497 = vmatprep.subr.mxu0 0.0
        %v498 = vand.u32 %v317, 4294901760
        %v499 = vsub.f32 %v317, %v498
        %500 = vmatpush1.xpose.msra.mxu0 %v499
        %501 = vmatprep.subr.mxu0 0.0
        %502 = vmatpush1.xpose.msra.mxu0 0.0
        %503 = vmatprep.subr.mxu0 0.0
        %504 = vmatpush1.xpose.msra.mxu0 0.0
        %505 = vmatprep.subr.mxu0 0.0
        %506 = vmatpush1.xpose.msra.mxu0 0.0
        %507 = vmatprep.subr.mxu0 0.0
        %508 = vmatpush1.xpose.msra.mxu0 0.0
        %509 = vmatprep.subr.mxu0 0.0
        %510 = vmatpush1.xpose.msra.mxu0 0.0
        %511 = vmatprep.subr.mxu0 0.0
        %512 = vmatpush1.xpose.msra.mxu0 0.0
        %513 = vmatprep.subr.mxu0 0.0
        %514 = vmatpush1.xpose.msra.mxu0 0.0
        %515 = vmatprep.subr.mxu0 0.0
        %516 = vmatpush1.xpose.msra.mxu0 0.0
        %517 = vmatprep.subr.mxu0 0.0
        %518 = vmatpush1.xpose.msra.mxu0 0.0
        %519 = vmatprep.subr.mxu0 0.0
        %520 = vmatpush1.xpose.msra.mxu0 0.0
        %521 = vmatprep.subr.mxu0 0.0
        %522 = vmatpush1.xpose.msra.mxu0 0.0
        %523 = vmatprep.subr.mxu0 0.0
        %524 = vmatpush1.xpose.msra.mxu0 0.0
        %525 = vmatprep.subr.mxu0 0.0
        %526 = vmatpush1.xpose.msra.mxu0 0.0
        %527 = vmatprep.subr.mxu0 0.0
        %528 = vmatpush1.xpose.msra.mxu0 0.0
        %529 = vmatprep.subr.mxu0 0.0
        %530 = vmatpush1.xpose.msra.mxu0 0.0
        %531 = vmatprep.subr.mxu0 0.0
        %532 = vmatpush1.xpose.msra.mxu0 0.0
        %533 = vmatprep.subr.mxu0 0.0
        %534 = vmatpush1.xpose.msra.mxu0 0.0
        %535 = vmatprep.subr.mxu0 0.0
        %536 = vmatpush1.xpose.msra.mxu0 0.0
        %537 = vmatprep.subr.mxu0 0.0
        %538 = vmatpush1.xpose.msra.mxu0 0.0
        %539 = vmatprep.subr.mxu0 0.0
        %540 = vmatpush1.xpose.msra.mxu0 0.0
        %541 = vmatprep.subr.mxu0 0.0
        %542 = vmatpush1.xpose.msra.mxu0 0.0
        %543 = vmatprep.subr.mxu0 0.0
        %544 = vmatpush1.xpose.msra.mxu0 0.0
        %545 = vmatprep.subr.mxu0 0.0
        %546 = vmatpush1.xpose.msra.mxu0 0.0
        %547 = vmatprep.subr.mxu0 0.0
        %548 = vmatpush1.xpose.msra.mxu0 0.0
        %549 = vmatprep.subr.mxu0 0.0
        %550 = vmatpush1.xpose.msra.mxu0 0.0
        %551 = vmatprep.subr.mxu0 0.0
        %552 = vmatpush1.xpose.msra.mxu0 0.0
        %553 = vmatprep.subr.mxu0 0.0
        %554 = vmatpush1.xpose.msra.mxu0 0.0
        %555 = vmatprep.subr.mxu0 0.0
        %556 = vmatpush1.xpose.msra.mxu0 0.0
        %557 = vmatprep.subr.mxu0 0.0
        %558 = vmatpush1.xpose.msra.mxu0 0.0
        %559 = vmatprep.subr.mxu0 0.0
        %560 = vmatpush1.xpose.msra.mxu0 0.0
        %561 = vmatprep.mubr.f32.mxu0 0.0
        %v562 = vand.u32 %v308, 4294901760
        %v563 = vsub.f32 %v308, %v562
        %564 = vmatmul.mubr.f32.gmra.mrb[0].mxu0 %v563
        %v565 = vpop.f32.mrb[0].mxu0
        %v566 = vadd.f32 %v484, %v565
        %v567 = vpop.f32.mrb[0].mxu0
        %568 = vmatprep.mubr.f32.mxu0 0.0
        %v569 = vand.u32 %v311, 4294901760
        %v570 = vsub.f32 %v311, %v569
        %571 = vmatmul.mubr.f32.gmra.mrb[0].mxu0 %v570
        %v572 = vpop.f32.mrb[0].mxu0
        %v573 = vadd.f32 %v490, %v572
        %v574 = vpop.f32.mrb[0].mxu0
        %575 = vdwg.mxu0
        %576 = vmatprep.subr.mxu0 0.0
        %v577 = vand.u32 %v314, 4294901760
        %578 = vmatpush1.xpose.msra.mxu0 %v577
        %579 = vmatprep.subr.mxu0 0.0
        %v580 = vand.u32 %v317, 4294901760
        %581 = vmatpush1.xpose.msra.mxu0 %v580
        %582 = vmatprep.subr.mxu0 0.0
        %583 = vmatpush1.xpose.msra.mxu0 0.0
        %584 = vmatprep.subr.mxu0 0.0
        %585 = vmatpush1.xpose.msra.mxu0 0.0
        %586 = vmatprep.subr.mxu0 0.0
        %587 = vmatpush1.xpose.msra.mxu0 0.0
        %588 = vmatprep.subr.mxu0 0.0
        %589 = vmatpush1.xpose.msra.mxu0 0.0
        %590 = vmatprep.subr.mxu0 0.0
        %591 = vmatpush1.xpose.msra.mxu0 0.0
        %592 = vmatprep.subr.mxu0 0.0
        %593 = vmatpush1.xpose.msra.mxu0 0.0
        %594 = vmatprep.subr.mxu0 0.0
        %595 = vmatpush1.xpose.msra.mxu0 0.0
        %596 = vmatprep.subr.mxu0 0.0
        %597 = vmatpush1.xpose.msra.mxu0 0.0
        %598 = vmatprep.subr.mxu0 0.0
        %599 = vmatpush1.xpose.msra.mxu0 0.0
        %600 = vmatprep.subr.mxu0 0.0
        %601 = vmatpush1.xpose.msra.mxu0 0.0
        %602 = vmatprep.subr.mxu0 0.0
        %603 = vmatpush1.xpose.msra.mxu0 0.0
        %604 = vmatprep.subr.mxu0 0.0
        %605 = vmatpush1.xpose.msra.mxu0 0.0
        %606 = vmatprep.subr.mxu0 0.0
        %607 = vmatpush1.xpose.msra.mxu0 0.0
        %608 = vmatprep.subr.mxu0 0.0
        %609 = vmatpush1.xpose.msra.mxu0 0.0
        %610 = vmatprep.subr.mxu0 0.0
        %611 = vmatpush1.xpose.msra.mxu0 0.0
        %612 = vmatprep.subr.mxu0 0.0
        %613 = vmatpush1.xpose.msra.mxu0 0.0
        %614 = vmatprep.subr.mxu0 0.0
        %615 = vmatpush1.xpose.msra.mxu0 0.0
        %616 = vmatprep.subr.mxu0 0.0
        %617 = vmatpush1.xpose.msra.mxu0 0.0
        %618 = vmatprep.subr.mxu0 0.0
        %619 = vmatpush1.xpose.msra.mxu0 0.0
        %620 = vmatprep.subr.mxu0 0.0
        %621 = vmatpush1.xpose.msra.mxu0 0.0
        %622 = vmatprep.subr.mxu0 0.0
        %623 = vmatpush1.xpose.msra.mxu0 0.0
        %624 = vmatprep.subr.mxu0 0.0
        %625 = vmatpush1.xpose.msra.mxu0 0.0
        %626 = vmatprep.subr.mxu0 0.0
        %627 = vmatpush1.xpose.msra.mxu0 0.0
        %628 = vmatprep.subr.mxu0 0.0
        %629 = vmatpush1.xpose.msra.mxu0 0.0
        %630 = vmatprep.subr.mxu0 0.0
        %631 = vmatpush1.xpose.msra.mxu0 0.0
        %632 = vmatprep.subr.mxu0 0.0
        %633 = vmatpush1.xpose.msra.mxu0 0.0
        %634 = vmatprep.subr.mxu0 0.0
        %635 = vmatpush1.xpose.msra.mxu0 0.0
        %636 = vmatprep.subr.mxu0 0.0
        %637 = vmatpush1.xpose.msra.mxu0 0.0
        %638 = vmatprep.subr.mxu0 0.0
        %639 = vmatpush1.xpose.msra.mxu0 0.0
        %640 = vmatprep.subr.mxu0 0.0
        %641 = vmatpush1.xpose.msra.mxu0 0.0
        %642 = vmatprep.mubr.f32.mxu0 0.0
        %v643 = vand.u32 %v308, 4294901760
        %v644 = vsub.f32 %v308, %v643
        %v645 = vand.u32 %v644, 4294901760
        %646 = vmatmul.mubr.f32.gmra.mrb[0].mxu0 %v645
        %v647 = vpop.f32.mrb[0].mxu0
        %v648 = vadd.f32 %v566, %v647
        %v649 = vpop.f32.mrb[0].mxu0
        %650 = vmatprep.mubr.f32.mxu0 0.0
        %v651 = vand.u32 %v311, 4294901760
        %v652 = vsub.f32 %v311, %v651
        %v653 = vand.u32 %v652, 4294901760
        %654 = vmatmul.mubr.f32.gmra.mrb[0].mxu0 %v653
        %v655 = vpop.f32.mrb[0].mxu0
        %v656 = vadd.f32 %v573, %v655
        %v657 = vpop.f32.mrb[0].mxu0
        %658 = vdwg.mxu0
        %659 = vmatprep.subr.mxu0 0.0
        %v660 = vand.u32 %v314, 4294901760
        %v661 = vsub.f32 %v314, %v660
        %v662 = vand.u32 %v661, 4294901760
        %663 = vmatpush1.xpose.msra.mxu0 %v662
        %664 = vmatprep.subr.mxu0 0.0
        %v665 = vand.u32 %v317, 4294901760
        %v666 = vsub.f32 %v317, %v665
        %v667 = vand.u32 %v666, 4294901760
        %668 = vmatpush1.xpose.msra.mxu0 %v667
        %669 = vmatprep.subr.mxu0 0.0
        %670 = vmatpush1.xpose.msra.mxu0 0.0
        %671 = vmatprep.subr.mxu0 0.0
        %672 = vmatpush1.xpose.msra.mxu0 0.0
        %673 = vmatprep.subr.mxu0 0.0
        %674 = vmatpush1.xpose.msra.mxu0 0.0
        %675 = vmatprep.subr.mxu0 0.0
        %676 = vmatpush1.xpose.msra.mxu0 0.0
        %677 = vmatprep.subr.mxu0 0.0
        %678 = vmatpush1.xpose.msra.mxu0 0.0
        %679 = vmatprep.subr.mxu0 0.0
        %680 = vmatpush1.xpose.msra.mxu0 0.0
        %681 = vmatprep.subr.mxu0 0.0
        %682 = vmatpush1.xpose.msra.mxu0 0.0
        %683 = vmatprep.subr.mxu0 0.0
        %684 = vmatpush1.xpose.msra.mxu0 0.0
        %685 = vmatprep.subr.mxu0 0.0
        %686 = vmatpush1.xpose.msra.mxu0 0.0
        %687 = vmatprep.subr.mxu0 0.0
        %688 = vmatpush1.xpose.msra.mxu0 0.0
        %689 = vmatprep.subr.mxu0 0.0
        %690 = vmatpush1.xpose.msra.mxu0 0.0
        %691 = vmatprep.subr.mxu0 0.0
        %692 = vmatpush1.xpose.msra.mxu0 0.0
        %693 = vmatprep.subr.mxu0 0.0
        %694 = vmatpush1.xpose.msra.mxu0 0.0
        %695 = vmatprep.subr.mxu0 0.0
        %696 = vmatpush1.xpose.msra.mxu0 0.0
        %697 = vmatprep.subr.mxu0 0.0
        %698 = vmatpush1.xpose.msra.mxu0 0.0
        %699 = vmatprep.subr.mxu0 0.0
        %700 = vmatpush1.xpose.msra.mxu0 0.0
        %701 = vmatprep.subr.mxu0 0.0
        %702 = vmatpush1.xpose.msra.mxu0 0.0
        %703 = vmatprep.subr.mxu0 0.0
        %704 = vmatpush1.xpose.msra.mxu0 0.0
        %705 = vmatprep.subr.mxu0 0.0
        %706 = vmatpush1.xpose.msra.mxu0 0.0
        %707 = vmatprep.subr.mxu0 0.0
        %708 = vmatpush1.xpose.msra.mxu0 0.0
        %709 = vmatprep.subr.mxu0 0.0
        %710 = vmatpush1.xpose.msra.mxu0 0.0
        %711 = vmatprep.subr.mxu0 0.0
        %712 = vmatpush1.xpose.msra.mxu0 0.0
        %713 = vmatprep.subr.mxu0 0.0
        %714 = vmatpush1.xpose.msra.mxu0 0.0
        %715 = vmatprep.subr.mxu0 0.0
        %716 = vmatpush1.xpose.msra.mxu0 0.0
        %717 = vmatprep.subr.mxu0 0.0
        %718 = vmatpush1.xpose.msra.mxu0 0.0
        %719 = vmatprep.subr.mxu0 0.0
        %720 = vmatpush1.xpose.msra.mxu0 0.0
        %721 = vmatprep.subr.mxu0 0.0
        %722 = vmatpush1.xpose.msra.mxu0 0.0
        %723 = vmatprep.subr.mxu0 0.0
        %724 = vmatpush1.xpose.msra.mxu0 0.0
        %725 = vmatprep.subr.mxu0 0.0
        %726 = vmatpush1.xpose.msra.mxu0 0.0
        %727 = vmatprep.subr.mxu0 0.0
        %728 = vmatpush1.xpose.msra.mxu0 0.0
        %729 = vmatprep.mubr.f32.mxu0 0.0
        %v730 = vand.u32 %v308, 4294901760
        %731 = vmatmul.mubr.f32.gmra.mrb[0].mxu0 %v730
        %v732 = vpop.f32.mrb[0].mxu0
        %v733 = vadd.f32 %v648, %v732
        %v734 = vpop.f32.mrb[0].mxu0
        %735 = vmatprep.mubr.f32.mxu0 0.0
        %v736 = vand.u32 %v311, 4294901760
        %737 = vmatmul.mubr.f32.gmra.mrb[0].mxu0 %v736
        %v738 = vpop.f32.mrb[0].mxu0
        %v739 = vadd.f32 %v656, %v738
        %v740 = vpop.f32.mrb[0].mxu0
        %741 = vdwg.mxu0
        %742 = vmatprep.subr.mxu0 0.0
        %v743 = vand.u32 %v314, 4294901760
        %744 = vmatpush1.xpose.msra.mxu0 %v743
        %745 = vmatprep.subr.mxu0 0.0
        %v746 = vand.u32 %v317, 4294901760
        %747 = vmatpush1.xpose.msra.mxu0 %v746
        %748 = vmatprep.subr.mxu0 0.0
        %749 = vmatpush1.xpose.msra.mxu0 0.0
        %750 = vmatprep.subr.mxu0 0.0
        %751 = vmatpush1.xpose.msra.mxu0 0.0
        %752 = vmatprep.subr.mxu0 0.0
        %753 = vmatpush1.xpose.msra.mxu0 0.0
        %754 = vmatprep.subr.mxu0 0.0
        %755 = vmatpush1.xpose.msra.mxu0 0.0
        %756 = vmatprep.subr.mxu0 0.0
        %757 = vmatpush1.xpose.msra.mxu0 0.0
        %758 = vmatprep.subr.mxu0 0.0
        %759 = vmatpush1.xpose.msra.mxu0 0.0
        %760 = vmatprep.subr.mxu0 0.0
        %761 = vmatpush1.xpose.msra.mxu0 0.0
        %762 = vmatprep.subr.mxu0 0.0
        %763 = vmatpush1.xpose.msra.mxu0 0.0
        %764 = vmatprep.subr.mxu0 0.0
        %765 = vmatpush1.xpose.msra.mxu0 0.0
        %766 = vmatprep.subr.mxu0 0.0
        %767 = vmatpush1.xpose.msra.mxu0 0.0
        %768 = vmatprep.subr.mxu0 0.0
        %769 = vmatpush1.xpose.msra.mxu0 0.0
        %770 = vmatprep.subr.mxu0 0.0
        %771 = vmatpush1.xpose.msra.mxu0 0.0
        %772 = vmatprep.subr.mxu0 0.0
        %773 = vmatpush1.xpose.msra.mxu0 0.0
        %774 = vmatprep.subr.mxu0 0.0
        %775 = vmatpush1.xpose.msra.mxu0 0.0
        %776 = vmatprep.subr.mxu0 0.0
        %777 = vmatpush1.xpose.msra.mxu0 0.0
        %778 = vmatprep.subr.mxu0 0.0
        %779 = vmatpush1.xpose.msra.mxu0 0.0
        %780 = vmatprep.subr.mxu0 0.0
        %781 = vmatpush1.xpose.msra.mxu0 0.0
        %782 = vmatprep.subr.mxu0 0.0
        %783 = vmatpush1.xpose.msra.mxu0 0.0
        %784 = vmatprep.subr.mxu0 0.0
        %785 = vmatpush1.xpose.msra.mxu0 0.0
        %786 = vmatprep.subr.mxu0 0.0
        %787 = vmatpush1.xpose.msra.mxu0 0.0
        %788 = vmatprep.subr.mxu0 0.0
        %789 = vmatpush1.xpose.msra.mxu0 0.0
        %790 = vmatprep.subr.mxu0 0.0
        %791 = vmatpush1.xpose.msra.mxu0 0.0
        %792 = vmatprep.subr.mxu0 0.0
        %793 = vmatpush1.xpose.msra.mxu0 0.0
        %794 = vmatprep.subr.mxu0 0.0
        %795 = vmatpush1.xpose.msra.mxu0 0.0
        %796 = vmatprep.subr.mxu0 0.0
        %797 = vmatpush1.xpose.msra.mxu0 0.0
        %798 = vmatprep.subr.mxu0 0.0
        %799 = vmatpush1.xpose.msra.mxu0 0.0
        %800 = vmatprep.subr.mxu0 0.0
        %801 = vmatpush1.xpose.msra.mxu0 0.0
        %802 = vmatprep.subr.mxu0 0.0
        %803 = vmatpush1.xpose.msra.mxu0 0.0
        %804 = vmatprep.subr.mxu0 0.0
        %805 = vmatpush1.xpose.msra.mxu0 0.0
        %806 = vmatprep.subr.mxu0 0.0
        %807 = vmatpush1.xpose.msra.mxu0 0.0
        %808 = vmatprep.mubr.f32.mxu0 0.0
        %v809 = vand.u32 %v308, 4294901760
        %810 = vmatmul.mubr.f32.gmra.mrb[0].mxu0 %v809
        %v811 = vpop.f32.mrb[0].mxu0
        %v812 = vadd.f32 %v733, %v811
        %v813 = vpop.f32.mrb[0].mxu0
        %814 = vmatprep.mubr.f32.mxu0 0.0
        %v815 = vand.u32 %v311, 4294901760
        %816 = vmatmul.mubr.f32.gmra.mrb[0].mxu0 %v815
        %v817 = vpop.f32.mrb[0].mxu0
        %v818 = vadd.f32 %v739, %v817
        %v819 = vpop.f32.mrb[0].mxu0
        %820 = vdwg.mxu0
        %v821 = vlaneseq
        %v822 = vand.u32 %v821, 127
        %vm823 = vcmask 130048
        %v824 = vsel %vm823, %v812, inf
        %825 = vmin.index.xlane.f32.xlu0 %v824
        %v826 = vpop.xlane.xlu0 %825
        %v827 = vsel %vm823, %v818, inf
        %828 = vmin.index.xlane.f32.xlu0 %v827
        %v829 = vpop.xlane.xlu0 %828
        %vm830 = vcmp.eq.s32.totalorder %v822, %v826
        %vm831 = vcmp.eq.s32.totalorder %v822, %v829
        %v832 = vsel %vm830, inf, %v812
        %v833 = vsel %vm831, inf, %v818
        %v834 = vsel %vm823, %v832, inf
        %835 = vmin.index.xlane.f32.xlu0 %v834
        %v836 = vpop.xlane.xlu0 %835
        %v837 = vsel %vm823, %v833, inf
        %838 = vmin.index.xlane.f32.xlu0 %v837
        %v839 = vpop.xlane.xlu0 %838
        %vm840 = vcmp.eq.s32.totalorder %v822, %v836
        %vm841 = vcmp.eq.s32.totalorder %v822, %v839
        %v842 = vsel %vm840, inf, %v832
        %v843 = vsel %vm841, inf, %v833
        %v844 = vsel %vm823, %v842, inf
        %845 = vmin.index.xlane.f32.xlu0 %v844
        %v846 = vpop.xlane.xlu0 %845
        %v847 = vsel %vm823, %v843, inf
        %848 = vmin.index.xlane.f32.xlu0 %v847
        %v849 = vpop.xlane.xlu0 %848
        %vm850 = vcmp.eq.s32.totalorder %v822, %v846
        %vm851 = vcmp.eq.s32.totalorder %v822, %v849
        %v852 = vsel %vm850, inf, %v842
        %v853 = vsel %vm851, inf, %v843
        %v854 = vsel %vm823, %v852, inf
        %855 = vmin.index.xlane.f32.xlu0 %v854
        %v856 = vpop.xlane.xlu0 %855
        %v857 = vsel %vm823, %v853, inf
        %858 = vmin.index.xlane.f32.xlu0 %v857
        %v859 = vpop.xlane.xlu0 %858
        %860 = vset.pattern.permute.xlu0 0
        %861 = vperm.xlu0 %860, %v826
        %v862 = vpop.permute.xlu0 %861
        %863 = vset.pattern.permute.xlu0 0
        %864 = vperm.xlu0 %863, %v829
        %v865 = vpop.permute.xlu0 %864
        %866 = vset.pattern.permute.xlu0 0
        %867 = vperm.xlu0 %866, %v836
        %v868 = vpop.permute.xlu0 %867
        %869 = vset.pattern.permute.xlu0 0
        %870 = vperm.xlu0 %869, %v839
        %v871 = vpop.permute.xlu0 %870
        %872 = vset.pattern.permute.xlu0 0
        %873 = vperm.xlu0 %872, %v846
        %v874 = vpop.permute.xlu0 %873
        %875 = vset.pattern.permute.xlu0 0
        %876 = vperm.xlu0 %875, %v849
        %v877 = vpop.permute.xlu0 %876
        %878 = vset.pattern.permute.xlu0 0
        %879 = vperm.xlu0 %878, %v856
        %v880 = vpop.permute.xlu0 %879
        %881 = vset.pattern.permute.xlu0 0
        %882 = vperm.xlu0 %881, %v859
        %v883 = vpop.permute.xlu0 %882
        %vm884 = vcmp.eq.s32.totalorder %v822, %v862
        %vm885 = vcmp.eq.s32.totalorder %v822, %v865
        %vm886 = vcmp.eq.s32.totalorder %v822, %v868
        %vm887 = vcmp.eq.s32.totalorder %v822, %v871
        %vm888 = vcmp.eq.s32.totalorder %v822, %v874
        %vm889 = vcmp.eq.s32.totalorder %v822, %v877
        %vm890 = vcmp.eq.s32.totalorder %v822, %v880
        %vm891 = vcmp.eq.s32.totalorder %v822, %v883
        %v892 = vsel %vm884, 1, 0
        %v893 = vsel %vm885, 1, 0
        %v894 = vsel %vm886, 1, 0
        %v895 = vsel %vm887, 1, 0
        %v896 = vsel %vm888, 1, 0
        %v897 = vsel %vm889, 1, 0
        %v898 = vsel %vm890, 1, 0
        %v899 = vsel %vm891, 1, 0
        %v900 = vcvt.s32.f32 %v892
        %v901 = vcvt.s32.f32 %v893
        %v902 = vcvt.s32.f32 %v894
        %v903 = vcvt.s32.f32 %v895
        %v904 = vcvt.s32.f32 %v896
        %v905 = vcvt.s32.f32 %v897
        %v906 = vcvt.s32.f32 %v898
        %v907 = vcvt.s32.f32 %v899
        %v909 = vsel %vm823, %v900, 0
        %v912 = vsel %vm823, %v901, 0
        %v915 = vsel %vm823, %v902, 0
        %v918 = vsel %vm823, %v903, 0
        %v921 = vsel %vm823, %v904, 0
        %v924 = vsel %vm823, %v905, 0
        %v927 = vsel %vm823, %v906, 0
        %v930 = vsel %vm823, %v907, 0
        %932 = vmatprep.subr.mxu0 0.0
        %v933 = vand.u32 %v290, 4294901760
        %934 = vmatpush1.msra.mxu0 %v933
        %935 = vmatprep.subr.mxu0 0.0
        %v936 = vand.u32 %v291, 4294901760
        %937 = vmatpush1.msra.mxu0 %v936
        %938 = vmatprep.subr.mxu0 0.0
        %939 = vmatpush1.msra.mxu0 0.0
        %940 = vmatprep.subr.mxu0 0.0
        %941 = vmatpush1.msra.mxu0 0.0
        %942 = vmatprep.subr.mxu0 0.0
        %943 = vmatpush1.msra.mxu0 0.0
        %944 = vmatprep.subr.mxu0 0.0
        %945 = vmatpush1.msra.mxu0 0.0
        %946 = vmatprep.subr.mxu0 0.0
        %947 = vmatpush1.msra.mxu0 0.0
        %948 = vmatprep.subr.mxu0 0.0
        %949 = vmatpush1.msra.mxu0 0.0
        %950 = vmatprep.subr.mxu0 0.0
        %951 = vmatpush1.msra.mxu0 0.0
        %952 = vmatprep.subr.mxu0 0.0
        %953 = vmatpush1.msra.mxu0 0.0
        %954 = vmatprep.subr.mxu0 0.0
        %955 = vmatpush1.msra.mxu0 0.0
        %956 = vmatprep.subr.mxu0 0.0
        %957 = vmatpush1.msra.mxu0 0.0
        %958 = vmatprep.subr.mxu0 0.0
        %959 = vmatpush1.msra.mxu0 0.0
        %960 = vmatprep.subr.mxu0 0.0
        %961 = vmatpush1.msra.mxu0 0.0
        %962 = vmatprep.subr.mxu0 0.0
        %963 = vmatpush1.msra.mxu0 0.0
        %964 = vmatprep.subr.mxu0 0.0
        %965 = vmatpush1.msra.mxu0 0.0
        %966 = vmatprep.subr.mxu0 0.0
        %967 = vmatpush1.msra.mxu0 0.0
        %968 = vmatprep.subr.mxu0 0.0
        %969 = vmatpush1.msra.mxu0 0.0
        %970 = vmatprep.subr.mxu0 0.0
        %971 = vmatpush1.msra.mxu0 0.0
        %972 = vmatprep.subr.mxu0 0.0
        %973 = vmatpush1.msra.mxu0 0.0
        %974 = vmatprep.subr.mxu0 0.0
        %975 = vmatpush1.msra.mxu0 0.0
        %976 = vmatprep.subr.mxu0 0.0
        %977 = vmatpush1.msra.mxu0 0.0
        %978 = vmatprep.subr.mxu0 0.0
        %979 = vmatpush1.msra.mxu0 0.0
        %980 = vmatprep.subr.mxu0 0.0
        %981 = vmatpush1.msra.mxu0 0.0
        %982 = vmatprep.subr.mxu0 0.0
        %983 = vmatpush1.msra.mxu0 0.0
        %984 = vmatprep.subr.mxu0 0.0
        %985 = vmatpush1.msra.mxu0 0.0
        %986 = vmatprep.subr.mxu0 0.0
        %987 = vmatpush1.msra.mxu0 0.0
        %988 = vmatprep.subr.mxu0 0.0
        %989 = vmatpush1.msra.mxu0 0.0
        %990 = vmatprep.subr.mxu0 0.0
        %991 = vmatpush1.msra.mxu0 0.0
        %992 = vmatprep.subr.mxu0 0.0
        %993 = vmatpush1.msra.mxu0 0.0
        %994 = vmatprep.subr.mxu0 0.0
        %995 = vmatpush1.msra.mxu0 0.0
        %996 = vmatprep.subr.mxu0 0.0
        %997 = vmatpush1.msra.mxu0 0.0
        %998 = vmatprep.mubr.f32.mxu0 0.0
        %v999 = vand.u32 %v909, 4294901760
        %v1000 = vsub.f32 %v909, %v999
        %v1001 = vand.u32 %v1000, 4294901760
        %v1002 = vsub.f32 %v1000, %v1001
        %v1003 = vand.u32 %v1002, 4294901760
        %1004 = vmatmul.mubr.f32.gmra.mrb[0].mxu0 %v1003
        %v1005 = vpop.f32.mrb[0].mxu0
        %v1006 = vadd.f32 0.0, %v1005
        %v1007 = vpop.f32.mrb[0].mxu0
        %1008 = vmatprep.mubr.f32.mxu0 0.0
        %v1009 = vand.u32 %v912, 4294901760
        %v1010 = vsub.f32 %v912, %v1009
        %v1011 = vand.u32 %v1010, 4294901760
        %v1012 = vsub.f32 %v1010, %v1011
        %v1013 = vand.u32 %v1012, 4294901760
        %1014 = vmatmul.mubr.f32.gmra.mrb[0].mxu0 %v1013
        %v1015 = vpop.f32.mrb[0].mxu0
        %v1016 = vadd.f32 0.0, %v1015
        %v1017 = vpop.f32.mrb[0].mxu0
        %1018 = vmatprep.mubr.f32.mxu0 0.0
        %v1019 = vand.u32 %v915, 4294901760
        %v1020 = vsub.f32 %v915, %v1019
        %v1021 = vand.u32 %v1020, 4294901760
        %v1022 = vsub.f32 %v1020, %v1021
        %v1023 = vand.u32 %v1022, 4294901760
        %1024 = vmatmul.mubr.f32.gmra.mrb[0].mxu0 %v1023
        %v1025 = vpop.f32.mrb[0].mxu0
        %v1026 = vadd.f32 0.0, %v1025
        %v1027 = vpop.f32.mrb[0].mxu0
        %1028 = vmatprep.mubr.f32.mxu0 0.0
        %v1029 = vand.u32 %v918, 4294901760
        %v1030 = vsub.f32 %v918, %v1029
        %v1031 = vand.u32 %v1030, 4294901760
        %v1032 = vsub.f32 %v1030, %v1031
        %v1033 = vand.u32 %v1032, 4294901760
        %1034 = vmatmul.mubr.f32.gmra.mrb[0].mxu0 %v1033
        %v1035 = vpop.f32.mrb[0].mxu0
        %v1036 = vadd.f32 0.0, %v1035
        %v1037 = vpop.f32.mrb[0].mxu0
        %1038 = vmatprep.mubr.f32.mxu0 0.0
        %v1039 = vand.u32 %v921, 4294901760
        %v1040 = vsub.f32 %v921, %v1039
        %v1041 = vand.u32 %v1040, 4294901760
        %v1042 = vsub.f32 %v1040, %v1041
        %v1043 = vand.u32 %v1042, 4294901760
        %1044 = vmatmul.mubr.f32.gmra.mrb[0].mxu0 %v1043
        %v1045 = vpop.f32.mrb[0].mxu0
        %v1046 = vadd.f32 0.0, %v1045
        %v1047 = vpop.f32.mrb[0].mxu0
        %1048 = vmatprep.mubr.f32.mxu0 0.0
        %v1049 = vand.u32 %v924, 4294901760
        %v1050 = vsub.f32 %v924, %v1049
        %v1051 = vand.u32 %v1050, 4294901760
        %v1052 = vsub.f32 %v1050, %v1051
        %v1053 = vand.u32 %v1052, 4294901760
        %1054 = vmatmul.mubr.f32.gmra.mrb[0].mxu0 %v1053
        %v1055 = vpop.f32.mrb[0].mxu0
        %v1056 = vadd.f32 0.0, %v1055
        %v1057 = vpop.f32.mrb[0].mxu0
        %1058 = vmatprep.mubr.f32.mxu0 0.0
        %v1059 = vand.u32 %v927, 4294901760
        %v1060 = vsub.f32 %v927, %v1059
        %v1061 = vand.u32 %v1060, 4294901760
        %v1062 = vsub.f32 %v1060, %v1061
        %v1063 = vand.u32 %v1062, 4294901760
        %1064 = vmatmul.mubr.f32.gmra.mrb[0].mxu0 %v1063
        %v1065 = vpop.f32.mrb[0].mxu0
        %v1066 = vadd.f32 0.0, %v1065
        %v1067 = vpop.f32.mrb[0].mxu0
        %1068 = vmatprep.mubr.f32.mxu0 0.0
        %v1069 = vand.u32 %v930, 4294901760
        %v1070 = vsub.f32 %v930, %v1069
        %v1071 = vand.u32 %v1070, 4294901760
        %v1072 = vsub.f32 %v1070, %v1071
        %v1073 = vand.u32 %v1072, 4294901760
        %1074 = vmatmul.mubr.f32.gmra.mrb[0].mxu0 %v1073
        %v1075 = vpop.f32.mrb[0].mxu0
        %v1076 = vadd.f32 0.0, %v1075
        %v1077 = vpop.f32.mrb[0].mxu0
        %1078 = vdwg.mxu0
        %1079 = vmatprep.subr.mxu0 0.0
        %v1080 = vand.u32 %v290, 4294901760
        %v1081 = vsub.f32 %v290, %v1080
        %v1082 = vand.u32 %v1081, 4294901760
        %v1083 = vsub.f32 %v1081, %v1082
        %v1084 = vand.u32 %v1083, 4294901760
        %1085 = vmatpush1.msra.mxu0 %v1084
        %1086 = vmatprep.subr.mxu0 0.0
        %v1087 = vand.u32 %v291, 4294901760
        %v1088 = vsub.f32 %v291, %v1087
        %v1089 = vand.u32 %v1088, 4294901760
        %v1090 = vsub.f32 %v1088, %v1089
        %v1091 = vand.u32 %v1090, 4294901760
        %1092 = vmatpush1.msra.mxu0 %v1091
        %1093 = vmatprep.subr.mxu0 0.0
        %1094 = vmatpush1.msra.mxu0 0.0
        %1095 = vmatprep.subr.mxu0 0.0
        %1096 = vmatpush1.msra.mxu0 0.0
        %1097 = vmatprep.subr.mxu0 0.0
        %1098 = vmatpush1.msra.mxu0 0.0
        %1099 = vmatprep.subr.mxu0 0.0
        %1100 = vmatpush1.msra.mxu0 0.0
        %1101 = vmatprep.subr.mxu0 0.0
        %1102 = vmatpush1.msra.mxu0 0.0
        %1103 = vmatprep.subr.mxu0 0.0
        %1104 = vmatpush1.msra.mxu0 0.0
        %1105 = vmatprep.subr.mxu0 0.0
        %1106 = vmatpush1.msra.mxu0 0.0
        %1107 = vmatprep.subr.mxu0 0.0
        %1108 = vmatpush1.msra.mxu0 0.0
        %1109 = vmatprep.subr.mxu0 0.0
        %1110 = vmatpush1.msra.mxu0 0.0
        %1111 = vmatprep.subr.mxu0 0.0
        %1112 = vmatpush1.msra.mxu0 0.0
        %1113 = vmatprep.subr.mxu0 0.0
        %1114 = vmatpush1.msra.mxu0 0.0
        %1115 = vmatprep.subr.mxu0 0.0
        %1116 = vmatpush1.msra.mxu0 0.0
        %1117 = vmatprep.subr.mxu0 0.0
        %1118 = vmatpush1.msra.mxu0 0.0
        %1119 = vmatprep.subr.mxu0 0.0
        %1120 = vmatpush1.msra.mxu0 0.0
        %1121 = vmatprep.subr.mxu0 0.0
        %1122 = vmatpush1.msra.mxu0 0.0
        %1123 = vmatprep.subr.mxu0 0.0
        %1124 = vmatpush1.msra.mxu0 0.0
        %1125 = vmatprep.subr.mxu0 0.0
        %1126 = vmatpush1.msra.mxu0 0.0
        %1127 = vmatprep.subr.mxu0 0.0
        %1128 = vmatpush1.msra.mxu0 0.0
        %1129 = vmatprep.subr.mxu0 0.0
        %1130 = vmatpush1.msra.mxu0 0.0
        %1131 = vmatprep.subr.mxu0 0.0
        %1132 = vmatpush1.msra.mxu0 0.0
        %1133 = vmatprep.subr.mxu0 0.0
        %1134 = vmatpush1.msra.mxu0 0.0
        %1135 = vmatprep.subr.mxu0 0.0
        %1136 = vmatpush1.msra.mxu0 0.0
        %1137 = vmatprep.subr.mxu0 0.0
        %1138 = vmatpush1.msra.mxu0 0.0
        %1139 = vmatprep.subr.mxu0 0.0
        %1140 = vmatpush1.msra.mxu0 0.0
        %1141 = vmatprep.subr.mxu0 0.0
        %1142 = vmatpush1.msra.mxu0 0.0
        %1143 = vmatprep.subr.mxu0 0.0
        %1144 = vmatpush1.msra.mxu0 0.0
        %1145 = vmatprep.subr.mxu0 0.0
        %1146 = vmatpush1.msra.mxu0 0.0
        %1147 = vmatprep.subr.mxu0 0.0
        %1148 = vmatpush1.msra.mxu0 0.0
        %1149 = vmatprep.subr.mxu0 0.0
        %1150 = vmatpush1.msra.mxu0 0.0
        %1151 = vmatprep.subr.mxu0 0.0
        %1152 = vmatpush1.msra.mxu0 0.0
        %1153 = vmatprep.mubr.f32.mxu0 0.0
        %v1154 = vand.u32 %v909, 4294901760
        %1155 = vmatmul.mubr.f32.gmra.mrb[0].mxu0 %v1154
        %v1156 = vpop.f32.mrb[0].mxu0
        %v1157 = vadd.f32 %v1006, %v1156
        %v1158 = vpop.f32.mrb[0].mxu0
        %1159 = vmatprep.mubr.f32.mxu0 0.0
        %v1160 = vand.u32 %v912, 4294901760
        %1161 = vmatmul.mubr.f32.gmra.mrb[0].mxu0 %v1160
        %v1162 = vpop.f32.mrb[0].mxu0
        %v1163 = vadd.f32 %v1016, %v1162
        %v1164 = vpop.f32.mrb[0].mxu0
        %1165 = vmatprep.mubr.f32.mxu0 0.0
        %v1166 = vand.u32 %v915, 4294901760
        %1167 = vmatmul.mubr.f32.gmra.mrb[0].mxu0 %v1166
        %v1168 = vpop.f32.mrb[0].mxu0
        %v1169 = vadd.f32 %v1026, %v1168
        %v1170 = vpop.f32.mrb[0].mxu0
        %1171 = vmatprep.mubr.f32.mxu0 0.0
        %v1172 = vand.u32 %v918, 4294901760
        %1173 = vmatmul.mubr.f32.gmra.mrb[0].mxu0 %v1172
        %v1174 = vpop.f32.mrb[0].mxu0
        %v1175 = vadd.f32 %v1036, %v1174
        %v1176 = vpop.f32.mrb[0].mxu0
        %1177 = vmatprep.mubr.f32.mxu0 0.0
        %v1178 = vand.u32 %v921, 4294901760
        %1179 = vmatmul.mubr.f32.gmra.mrb[0].mxu0 %v1178
        %v1180 = vpop.f32.mrb[0].mxu0
        %v1181 = vadd.f32 %v1046, %v1180
        %v1182 = vpop.f32.mrb[0].mxu0
        %1183 = vmatprep.mubr.f32.mxu0 0.0
        %v1184 = vand.u32 %v924, 4294901760
        %1185 = vmatmul.mubr.f32.gmra.mrb[0].mxu0 %v1184
        %v1186 = vpop.f32.mrb[0].mxu0
        %v1187 = vadd.f32 %v1056, %v1186
        %v1188 = vpop.f32.mrb[0].mxu0
        %1189 = vmatprep.mubr.f32.mxu0 0.0
        %v1190 = vand.u32 %v927, 4294901760
        %1191 = vmatmul.mubr.f32.gmra.mrb[0].mxu0 %v1190
        %v1192 = vpop.f32.mrb[0].mxu0
        %v1193 = vadd.f32 %v1066, %v1192
        %v1194 = vpop.f32.mrb[0].mxu0
        %1195 = vmatprep.mubr.f32.mxu0 0.0
        %v1196 = vand.u32 %v930, 4294901760
        %1197 = vmatmul.mubr.f32.gmra.mrb[0].mxu0 %v1196
        %v1198 = vpop.f32.mrb[0].mxu0
        %v1199 = vadd.f32 %v1076, %v1198
        %v1200 = vpop.f32.mrb[0].mxu0
        %1201 = vdwg.mxu0
        %1202 = vmatprep.subr.mxu0 0.0
        %v1203 = vand.u32 %v290, 4294901760
        %v1204 = vsub.f32 %v290, %v1203
        %1205 = vmatpush1.msra.mxu0 %v1204
        %1206 = vmatprep.subr.mxu0 0.0
        %v1207 = vand.u32 %v291, 4294901760
        %v1208 = vsub.f32 %v291, %v1207
        %1209 = vmatpush1.msra.mxu0 %v1208
        %1210 = vmatprep.subr.mxu0 0.0
        %1211 = vmatpush1.msra.mxu0 0.0
        %1212 = vmatprep.subr.mxu0 0.0
        %1213 = vmatpush1.msra.mxu0 0.0
        %1214 = vmatprep.subr.mxu0 0.0
        %1215 = vmatpush1.msra.mxu0 0.0
        %1216 = vmatprep.subr.mxu0 0.0
        %1217 = vmatpush1.msra.mxu0 0.0
        %1218 = vmatprep.subr.mxu0 0.0
        %1219 = vmatpush1.msra.mxu0 0.0
        %1220 = vmatprep.subr.mxu0 0.0
        %1221 = vmatpush1.msra.mxu0 0.0
        %1222 = vmatprep.subr.mxu0 0.0
        %1223 = vmatpush1.msra.mxu0 0.0
        %1224 = vmatprep.subr.mxu0 0.0
        %1225 = vmatpush1.msra.mxu0 0.0
        %1226 = vmatprep.subr.mxu0 0.0
        %1227 = vmatpush1.msra.mxu0 0.0
        %1228 = vmatprep.subr.mxu0 0.0
        %1229 = vmatpush1.msra.mxu0 0.0
        %1230 = vmatprep.subr.mxu0 0.0
        %1231 = vmatpush1.msra.mxu0 0.0
        %1232 = vmatprep.subr.mxu0 0.0
        %1233 = vmatpush1.msra.mxu0 0.0
        %1234 = vmatprep.subr.mxu0 0.0
        %1235 = vmatpush1.msra.mxu0 0.0
        %1236 = vmatprep.subr.mxu0 0.0
        %1237 = vmatpush1.msra.mxu0 0.0
        %1238 = vmatprep.subr.mxu0 0.0
        %1239 = vmatpush1.msra.mxu0 0.0
        %1240 = vmatprep.subr.mxu0 0.0
        %1241 = vmatpush1.msra.mxu0 0.0
        %1242 = vmatprep.subr.mxu0 0.0
        %1243 = vmatpush1.msra.mxu0 0.0
        %1244 = vmatprep.subr.mxu0 0.0
        %1245 = vmatpush1.msra.mxu0 0.0
        %1246 = vmatprep.subr.mxu0 0.0
        %1247 = vmatpush1.msra.mxu0 0.0
        %1248 = vmatprep.subr.mxu0 0.0
        %1249 = vmatpush1.msra.mxu0 0.0
        %1250 = vmatprep.subr.mxu0 0.0
        %1251 = vmatpush1.msra.mxu0 0.0
        %1252 = vmatprep.subr.mxu0 0.0
        %1253 = vmatpush1.msra.mxu0 0.0
        %1254 = vmatprep.subr.mxu0 0.0
        %1255 = vmatpush1.msra.mxu0 0.0
        %1256 = vmatprep.subr.mxu0 0.0
        %1257 = vmatpush1.msra.mxu0 0.0
        %1258 = vmatprep.subr.mxu0 0.0
        %1259 = vmatpush1.msra.mxu0 0.0
        %1260 = vmatprep.subr.mxu0 0.0
        %1261 = vmatpush1.msra.mxu0 0.0
        %1262 = vmatprep.subr.mxu0 0.0
        %1263 = vmatpush1.msra.mxu0 0.0
        %1264 = vmatprep.subr.mxu0 0.0
        %1265 = vmatpush1.msra.mxu0 0.0
        %1266 = vmatprep.subr.mxu0 0.0
        %1267 = vmatpush1.msra.mxu0 0.0
        %1268 = vmatprep.subr.mxu0 0.0
        %1269 = vmatpush1.msra.mxu0 0.0
        %1270 = vmatprep.mubr.f32.mxu0 0.0
        %v1271 = vand.u32 %v909, 4294901760
        %v1272 = vsub.f32 %v909, %v1271
        %1273 = vmatmul.mubr.f32.gmra.mrb[0].mxu0 %v1272
        %v1274 = vpop.f32.mrb[0].mxu0
        %v1275 = vadd.f32 %v1157, %v1274
        %v1276 = vpop.f32.mrb[0].mxu0
        %1277 = vmatprep.mubr.f32.mxu0 0.0
        %v1278 = vand.u32 %v912, 4294901760
        %v1279 = vsub.f32 %v912, %v1278
        %1280 = vmatmul.mubr.f32.gmra.mrb[0].mxu0 %v1279
        %v1281 = vpop.f32.mrb[0].mxu0
        %v1282 = vadd.f32 %v1163, %v1281
        %v1283 = vpop.f32.mrb[0].mxu0
        %1284 = vmatprep.mubr.f32.mxu0 0.0
        %v1285 = vand.u32 %v915, 4294901760
        %v1286 = vsub.f32 %v915, %v1285
        %1287 = vmatmul.mubr.f32.gmra.mrb[0].mxu0 %v1286
        %v1288 = vpop.f32.mrb[0].mxu0
        %v1289 = vadd.f32 %v1169, %v1288
        %v1290 = vpop.f32.mrb[0].mxu0
        %1291 = vmatprep.mubr.f32.mxu0 0.0
        %v1292 = vand.u32 %v918, 4294901760
        %v1293 = vsub.f32 %v918, %v1292
        %1294 = vmatmul.mubr.f32.gmra.mrb[0].mxu0 %v1293
        %v1295 = vpop.f32.mrb[0].mxu0
        %v1296 = vadd.f32 %v1175, %v1295
        %v1297 = vpop.f32.mrb[0].mxu0
        %1298 = vmatprep.mubr.f32.mxu0 0.0
        %v1299 = vand.u32 %v921, 4294901760
        %v1300 = vsub.f32 %v921, %v1299
        %1301 = vmatmul.mubr.f32.gmra.mrb[0].mxu0 %v1300
        %v1302 = vpop.f32.mrb[0].mxu0
        %v1303 = vadd.f32 %v1181, %v1302
        %v1304 = vpop.f32.mrb[0].mxu0
        %1305 = vmatprep.mubr.f32.mxu0 0.0
        %v1306 = vand.u32 %v924, 4294901760
        %v1307 = vsub.f32 %v924, %v1306
        %1308 = vmatmul.mubr.f32.gmra.mrb[0].mxu0 %v1307
        %v1309 = vpop.f32.mrb[0].mxu0
        %v1310 = vadd.f32 %v1187, %v1309
        %v1311 = vpop.f32.mrb[0].mxu0
        %1312 = vmatprep.mubr.f32.mxu0 0.0
        %v1313 = vand.u32 %v927, 4294901760
        %v1314 = vsub.f32 %v927, %v1313
        %1315 = vmatmul.mubr.f32.gmra.mrb[0].mxu0 %v1314
        %v1316 = vpop.f32.mrb[0].mxu0
        %v1317 = vadd.f32 %v1193, %v1316
        %v1318 = vpop.f32.mrb[0].mxu0
        %1319 = vmatprep.mubr.f32.mxu0 0.0
        %v1320 = vand.u32 %v930, 4294901760
        %v1321 = vsub.f32 %v930, %v1320
        %1322 = vmatmul.mubr.f32.gmra.mrb[0].mxu0 %v1321
        %v1323 = vpop.f32.mrb[0].mxu0
        %v1324 = vadd.f32 %v1199, %v1323
        %v1325 = vpop.f32.mrb[0].mxu0
        %1326 = vdwg.mxu0
        %1327 = vmatprep.subr.mxu0 0.0
        %v1328 = vand.u32 %v290, 4294901760
        %1329 = vmatpush1.msra.mxu0 %v1328
        %1330 = vmatprep.subr.mxu0 0.0
        %v1331 = vand.u32 %v291, 4294901760
        %1332 = vmatpush1.msra.mxu0 %v1331
        %1333 = vmatprep.subr.mxu0 0.0
        %1334 = vmatpush1.msra.mxu0 0.0
        %1335 = vmatprep.subr.mxu0 0.0
        %1336 = vmatpush1.msra.mxu0 0.0
        %1337 = vmatprep.subr.mxu0 0.0
        %1338 = vmatpush1.msra.mxu0 0.0
        %1339 = vmatprep.subr.mxu0 0.0
        %1340 = vmatpush1.msra.mxu0 0.0
        %1341 = vmatprep.subr.mxu0 0.0
        %1342 = vmatpush1.msra.mxu0 0.0
        %1343 = vmatprep.subr.mxu0 0.0
        %1344 = vmatpush1.msra.mxu0 0.0
        %1345 = vmatprep.subr.mxu0 0.0
        %1346 = vmatpush1.msra.mxu0 0.0
        %1347 = vmatprep.subr.mxu0 0.0
        %1348 = vmatpush1.msra.mxu0 0.0
        %1349 = vmatprep.subr.mxu0 0.0
        %1350 = vmatpush1.msra.mxu0 0.0
        %1351 = vmatprep.subr.mxu0 0.0
        %1352 = vmatpush1.msra.mxu0 0.0
        %1353 = vmatprep.subr.mxu0 0.0
        %1354 = vmatpush1.msra.mxu0 0.0
        %1355 = vmatprep.subr.mxu0 0.0
        %1356 = vmatpush1.msra.mxu0 0.0
        %1357 = vmatprep.subr.mxu0 0.0
        %1358 = vmatpush1.msra.mxu0 0.0
        %1359 = vmatprep.subr.mxu0 0.0
        %1360 = vmatpush1.msra.mxu0 0.0
        %1361 = vmatprep.subr.mxu0 0.0
        %1362 = vmatpush1.msra.mxu0 0.0
        %1363 = vmatprep.subr.mxu0 0.0
        %1364 = vmatpush1.msra.mxu0 0.0
        %1365 = vmatprep.subr.mxu0 0.0
        %1366 = vmatpush1.msra.mxu0 0.0
        %1367 = vmatprep.subr.mxu0 0.0
        %1368 = vmatpush1.msra.mxu0 0.0
        %1369 = vmatprep.subr.mxu0 0.0
        %1370 = vmatpush1.msra.mxu0 0.0
        %1371 = vmatprep.subr.mxu0 0.0
        %1372 = vmatpush1.msra.mxu0 0.0
        %1373 = vmatprep.subr.mxu0 0.0
        %1374 = vmatpush1.msra.mxu0 0.0
        %1375 = vmatprep.subr.mxu0 0.0
        %1376 = vmatpush1.msra.mxu0 0.0
        %1377 = vmatprep.subr.mxu0 0.0
        %1378 = vmatpush1.msra.mxu0 0.0
        %1379 = vmatprep.subr.mxu0 0.0
        %1380 = vmatpush1.msra.mxu0 0.0
        %1381 = vmatprep.subr.mxu0 0.0
        %1382 = vmatpush1.msra.mxu0 0.0
        %1383 = vmatprep.subr.mxu0 0.0
        %1384 = vmatpush1.msra.mxu0 0.0
        %1385 = vmatprep.subr.mxu0 0.0
        %1386 = vmatpush1.msra.mxu0 0.0
        %1387 = vmatprep.subr.mxu0 0.0
        %1388 = vmatpush1.msra.mxu0 0.0
        %1389 = vmatprep.subr.mxu0 0.0
        %1390 = vmatpush1.msra.mxu0 0.0
        %1391 = vmatprep.subr.mxu0 0.0
        %1392 = vmatpush1.msra.mxu0 0.0
        %1393 = vmatprep.mubr.f32.mxu0 0.0
        %v1394 = vand.u32 %v909, 4294901760
        %v1395 = vsub.f32 %v909, %v1394
        %v1396 = vand.u32 %v1395, 4294901760
        %1397 = vmatmul.mubr.f32.gmra.mrb[0].mxu0 %v1396
        %v1398 = vpop.f32.mrb[0].mxu0
        %v1399 = vadd.f32 %v1275, %v1398
        %v1400 = vpop.f32.mrb[0].mxu0
        %1401 = vmatprep.mubr.f32.mxu0 0.0
        %v1402 = vand.u32 %v912, 4294901760
        %v1403 = vsub.f32 %v912, %v1402
        %v1404 = vand.u32 %v1403, 4294901760
        %1405 = vmatmul.mubr.f32.gmra.mrb[0].mxu0 %v1404
        %v1406 = vpop.f32.mrb[0].mxu0
        %v1407 = vadd.f32 %v1282, %v1406
        %v1408 = vpop.f32.mrb[0].mxu0
        %1409 = vmatprep.mubr.f32.mxu0 0.0
        %v1410 = vand.u32 %v915, 4294901760
        %v1411 = vsub.f32 %v915, %v1410
        %v1412 = vand.u32 %v1411, 4294901760
        %1413 = vmatmul.mubr.f32.gmra.mrb[0].mxu0 %v1412
        %v1414 = vpop.f32.mrb[0].mxu0
        %v1415 = vadd.f32 %v1289, %v1414
        %v1416 = vpop.f32.mrb[0].mxu0
        %1417 = vmatprep.mubr.f32.mxu0 0.0
        %v1418 = vand.u32 %v918, 4294901760
        %v1419 = vsub.f32 %v918, %v1418
        %v1420 = vand.u32 %v1419, 4294901760
        %1421 = vmatmul.mubr.f32.gmra.mrb[0].mxu0 %v1420
        %v1422 = vpop.f32.mrb[0].mxu0
        %v1423 = vadd.f32 %v1296, %v1422
        %v1424 = vpop.f32.mrb[0].mxu0
        %1425 = vmatprep.mubr.f32.mxu0 0.0
        %v1426 = vand.u32 %v921, 4294901760
        %v1427 = vsub.f32 %v921, %v1426
        %v1428 = vand.u32 %v1427, 4294901760
        %1429 = vmatmul.mubr.f32.gmra.mrb[0].mxu0 %v1428
        %v1430 = vpop.f32.mrb[0].mxu0
        %v1431 = vadd.f32 %v1303, %v1430
        %v1432 = vpop.f32.mrb[0].mxu0
        %1433 = vmatprep.mubr.f32.mxu0 0.0
        %v1434 = vand.u32 %v924, 4294901760
        %v1435 = vsub.f32 %v924, %v1434
        %v1436 = vand.u32 %v1435, 4294901760
        %1437 = vmatmul.mubr.f32.gmra.mrb[0].mxu0 %v1436
        %v1438 = vpop.f32.mrb[0].mxu0
        %v1439 = vadd.f32 %v1310, %v1438
        %v1440 = vpop.f32.mrb[0].mxu0
        %1441 = vmatprep.mubr.f32.mxu0 0.0
        %v1442 = vand.u32 %v927, 4294901760
        %v1443 = vsub.f32 %v927, %v1442
        %v1444 = vand.u32 %v1443, 4294901760
        %1445 = vmatmul.mubr.f32.gmra.mrb[0].mxu0 %v1444
        %v1446 = vpop.f32.mrb[0].mxu0
        %v1447 = vadd.f32 %v1317, %v1446
        %v1448 = vpop.f32.mrb[0].mxu0
        %1449 = vmatprep.mubr.f32.mxu0 0.0
        %v1450 = vand.u32 %v930, 4294901760
        %v1451 = vsub.f32 %v930, %v1450
        %v1452 = vand.u32 %v1451, 4294901760
        %1453 = vmatmul.mubr.f32.gmra.mrb[0].mxu0 %v1452
        %v1454 = vpop.f32.mrb[0].mxu0
        %v1455 = vadd.f32 %v1324, %v1454
        %v1456 = vpop.f32.mrb[0].mxu0
        %1457 = vdwg.mxu0
        %1458 = vmatprep.subr.mxu0 0.0
        %v1459 = vand.u32 %v290, 4294901760
        %v1460 = vsub.f32 %v290, %v1459
        %v1461 = vand.u32 %v1460, 4294901760
        %1462 = vmatpush1.msra.mxu0 %v1461
        %1463 = vmatprep.subr.mxu0 0.0
        %v1464 = vand.u32 %v291, 4294901760
        %v1465 = vsub.f32 %v291, %v1464
        %v1466 = vand.u32 %v1465, 4294901760
        %1467 = vmatpush1.msra.mxu0 %v1466
        %1468 = vmatprep.subr.mxu0 0.0
        %1469 = vmatpush1.msra.mxu0 0.0
        %1470 = vmatprep.subr.mxu0 0.0
        %1471 = vmatpush1.msra.mxu0 0.0
        %1472 = vmatprep.subr.mxu0 0.0
        %1473 = vmatpush1.msra.mxu0 0.0
        %1474 = vmatprep.subr.mxu0 0.0
        %1475 = vmatpush1.msra.mxu0 0.0
        %1476 = vmatprep.subr.mxu0 0.0
        %1477 = vmatpush1.msra.mxu0 0.0
        %1478 = vmatprep.subr.mxu0 0.0
        %1479 = vmatpush1.msra.mxu0 0.0
        %1480 = vmatprep.subr.mxu0 0.0
        %1481 = vmatpush1.msra.mxu0 0.0
        %1482 = vmatprep.subr.mxu0 0.0
        %1483 = vmatpush1.msra.mxu0 0.0
        %1484 = vmatprep.subr.mxu0 0.0
        %1485 = vmatpush1.msra.mxu0 0.0
        %1486 = vmatprep.subr.mxu0 0.0
        %1487 = vmatpush1.msra.mxu0 0.0
        %1488 = vmatprep.subr.mxu0 0.0
        %1489 = vmatpush1.msra.mxu0 0.0
        %1490 = vmatprep.subr.mxu0 0.0
        %1491 = vmatpush1.msra.mxu0 0.0
        %1492 = vmatprep.subr.mxu0 0.0
        %1493 = vmatpush1.msra.mxu0 0.0
        %1494 = vmatprep.subr.mxu0 0.0
        %1495 = vmatpush1.msra.mxu0 0.0
        %1496 = vmatprep.subr.mxu0 0.0
        %1497 = vmatpush1.msra.mxu0 0.0
        %1498 = vmatprep.subr.mxu0 0.0
        %1499 = vmatpush1.msra.mxu0 0.0
        %1500 = vmatprep.subr.mxu0 0.0
        %1501 = vmatpush1.msra.mxu0 0.0
        %1502 = vmatprep.subr.mxu0 0.0
        %1503 = vmatpush1.msra.mxu0 0.0
        %1504 = vmatprep.subr.mxu0 0.0
        %1505 = vmatpush1.msra.mxu0 0.0
        %1506 = vmatprep.subr.mxu0 0.0
        %1507 = vmatpush1.msra.mxu0 0.0
        %1508 = vmatprep.subr.mxu0 0.0
        %1509 = vmatpush1.msra.mxu0 0.0
        %1510 = vmatprep.subr.mxu0 0.0
        %1511 = vmatpush1.msra.mxu0 0.0
        %1512 = vmatprep.subr.mxu0 0.0
        %1513 = vmatpush1.msra.mxu0 0.0
        %1514 = vmatprep.subr.mxu0 0.0
        %1515 = vmatpush1.msra.mxu0 0.0
        %1516 = vmatprep.subr.mxu0 0.0
        %1517 = vmatpush1.msra.mxu0 0.0
        %1518 = vmatprep.subr.mxu0 0.0
        %1519 = vmatpush1.msra.mxu0 0.0
        %1520 = vmatprep.subr.mxu0 0.0
        %1521 = vmatpush1.msra.mxu0 0.0
        %1522 = vmatprep.subr.mxu0 0.0
        %1523 = vmatpush1.msra.mxu0 0.0
        %1524 = vmatprep.subr.mxu0 0.0
        %1525 = vmatpush1.msra.mxu0 0.0
        %1526 = vmatprep.subr.mxu0 0.0
        %1527 = vmatpush1.msra.mxu0 0.0
        %1528 = vmatprep.mubr.f32.mxu0 0.0
        %v1529 = vand.u32 %v909, 4294901760
        %1530 = vmatmul.mubr.f32.gmra.mrb[0].mxu0 %v1529
        %v1531 = vpop.f32.mrb[0].mxu0
        %v1532 = vadd.f32 %v1399, %v1531
        %v1533 = vpop.f32.mrb[0].mxu0
        %1534 = vmatprep.mubr.f32.mxu0 0.0
        %v1535 = vand.u32 %v912, 4294901760
        %1536 = vmatmul.mubr.f32.gmra.mrb[0].mxu0 %v1535
        %v1537 = vpop.f32.mrb[0].mxu0
        %v1538 = vadd.f32 %v1407, %v1537
        %v1539 = vpop.f32.mrb[0].mxu0
        %1540 = vmatprep.mubr.f32.mxu0 0.0
        %v1541 = vand.u32 %v915, 4294901760
        %1542 = vmatmul.mubr.f32.gmra.mrb[0].mxu0 %v1541
        %v1543 = vpop.f32.mrb[0].mxu0
        %v1544 = vadd.f32 %v1415, %v1543
        %v1545 = vpop.f32.mrb[0].mxu0
        %1546 = vmatprep.mubr.f32.mxu0 0.0
        %v1547 = vand.u32 %v918, 4294901760
        %1548 = vmatmul.mubr.f32.gmra.mrb[0].mxu0 %v1547
        %v1549 = vpop.f32.mrb[0].mxu0
        %v1550 = vadd.f32 %v1423, %v1549
        %v1551 = vpop.f32.mrb[0].mxu0
        %1552 = vmatprep.mubr.f32.mxu0 0.0
        %v1553 = vand.u32 %v921, 4294901760
        %1554 = vmatmul.mubr.f32.gmra.mrb[0].mxu0 %v1553
        %v1555 = vpop.f32.mrb[0].mxu0
        %v1556 = vadd.f32 %v1431, %v1555
        %v1557 = vpop.f32.mrb[0].mxu0
        %1558 = vmatprep.mubr.f32.mxu0 0.0
        %v1559 = vand.u32 %v924, 4294901760
        %1560 = vmatmul.mubr.f32.gmra.mrb[0].mxu0 %v1559
        %v1561 = vpop.f32.mrb[0].mxu0
        %v1562 = vadd.f32 %v1439, %v1561
        %v1563 = vpop.f32.mrb[0].mxu0
        %1564 = vmatprep.mubr.f32.mxu0 0.0
        %v1565 = vand.u32 %v927, 4294901760
        %1566 = vmatmul.mubr.f32.gmra.mrb[0].mxu0 %v1565
        %v1567 = vpop.f32.mrb[0].mxu0
        %v1568 = vadd.f32 %v1447, %v1567
        %v1569 = vpop.f32.mrb[0].mxu0
        %1570 = vmatprep.mubr.f32.mxu0 0.0
        %v1571 = vand.u32 %v930, 4294901760
        %1572 = vmatmul.mubr.f32.gmra.mrb[0].mxu0 %v1571
        %v1573 = vpop.f32.mrb[0].mxu0
        %v1574 = vadd.f32 %v1455, %v1573
        %v1575 = vpop.f32.mrb[0].mxu0
        %1576 = vdwg.mxu0
        %1577 = vmatprep.subr.mxu0 0.0
        %v1578 = vand.u32 %v290, 4294901760
        %1579 = vmatpush1.msra.mxu0 %v1578
        %1580 = vmatprep.subr.mxu0 0.0
        %v1581 = vand.u32 %v291, 4294901760
        %1582 = vmatpush1.msra.mxu0 %v1581
        %1583 = vmatprep.subr.mxu0 0.0
        %1584 = vmatpush1.msra.mxu0 0.0
        %1585 = vmatprep.subr.mxu0 0.0
        %1586 = vmatpush1.msra.mxu0 0.0
        %1587 = vmatprep.subr.mxu0 0.0
        %1588 = vmatpush1.msra.mxu0 0.0
        %1589 = vmatprep.subr.mxu0 0.0
        %1590 = vmatpush1.msra.mxu0 0.0
        %1591 = vmatprep.subr.mxu0 0.0
        %1592 = vmatpush1.msra.mxu0 0.0
        %1593 = vmatprep.subr.mxu0 0.0
        %1594 = vmatpush1.msra.mxu0 0.0
        %1595 = vmatprep.subr.mxu0 0.0
        %1596 = vmatpush1.msra.mxu0 0.0
        %1597 = vmatprep.subr.mxu0 0.0
        %1598 = vmatpush1.msra.mxu0 0.0
        %1599 = vmatprep.subr.mxu0 0.0
        %1600 = vmatpush1.msra.mxu0 0.0
        %1601 = vmatprep.subr.mxu0 0.0
        %1602 = vmatpush1.msra.mxu0 0.0
        %1603 = vmatprep.subr.mxu0 0.0
        %1604 = vmatpush1.msra.mxu0 0.0
        %1605 = vmatprep.subr.mxu0 0.0
        %1606 = vmatpush1.msra.mxu0 0.0
        %1607 = vmatprep.subr.mxu0 0.0
        %1608 = vmatpush1.msra.mxu0 0.0
        %1609 = vmatprep.subr.mxu0 0.0
        %1610 = vmatpush1.msra.mxu0 0.0
        %1611 = vmatprep.subr.mxu0 0.0
        %1612 = vmatpush1.msra.mxu0 0.0
        %1613 = vmatprep.subr.mxu0 0.0
        %1614 = vmatpush1.msra.mxu0 0.0
        %1615 = vmatprep.subr.mxu0 0.0
        %1616 = vmatpush1.msra.mxu0 0.0
        %1617 = vmatprep.subr.mxu0 0.0
        %1618 = vmatpush1.msra.mxu0 0.0
        %1619 = vmatprep.subr.mxu0 0.0
        %1620 = vmatpush1.msra.mxu0 0.0
        %1621 = vmatprep.subr.mxu0 0.0
        %1622 = vmatpush1.msra.mxu0 0.0
        %1623 = vmatprep.subr.mxu0 0.0
        %1624 = vmatpush1.msra.mxu0 0.0
        %1625 = vmatprep.subr.mxu0 0.0
        %1626 = vmatpush1.msra.mxu0 0.0
        %1627 = vmatprep.subr.mxu0 0.0
        %1628 = vmatpush1.msra.mxu0 0.0
        %1629 = vmatprep.subr.mxu0 0.0
        %1630 = vmatpush1.msra.mxu0 0.0
        %1631 = vmatprep.subr.mxu0 0.0
        %1632 = vmatpush1.msra.mxu0 0.0
        %1633 = vmatprep.subr.mxu0 0.0
        %1634 = vmatpush1.msra.mxu0 0.0
        %1635 = vmatprep.subr.mxu0 0.0
        %1636 = vmatpush1.msra.mxu0 0.0
        %1637 = vmatprep.subr.mxu0 0.0
        %1638 = vmatpush1.msra.mxu0 0.0
        %1639 = vmatprep.subr.mxu0 0.0
        %1640 = vmatpush1.msra.mxu0 0.0
        %1641 = vmatprep.subr.mxu0 0.0
        %1642 = vmatpush1.msra.mxu0 0.0
        %1643 = vmatprep.mubr.f32.mxu0 0.0
        %v1644 = vand.u32 %v909, 4294901760
        %1645 = vmatmul.mubr.f32.gmra.mrb[0].mxu0 %v1644
        %v1646 = vpop.f32.mrb[0].mxu0
        %v1647 = vadd.f32 %v1532, %v1646
        %v1648 = vpop.f32.mrb[0].mxu0
        %1649 = vmatprep.mubr.f32.mxu0 0.0
        %v1650 = vand.u32 %v912, 4294901760
        %1651 = vmatmul.mubr.f32.gmra.mrb[0].mxu0 %v1650
        %v1652 = vpop.f32.mrb[0].mxu0
        %v1653 = vadd.f32 %v1538, %v1652
        %v1654 = vpop.f32.mrb[0].mxu0
        %1655 = vmatprep.mubr.f32.mxu0 0.0
        %v1656 = vand.u32 %v915, 4294901760
        %1657 = vmatmul.mubr.f32.gmra.mrb[0].mxu0 %v1656
        %v1658 = vpop.f32.mrb[0].mxu0
        %v1659 = vadd.f32 %v1544, %v1658
        %v1660 = vpop.f32.mrb[0].mxu0
        %1661 = vmatprep.mubr.f32.mxu0 0.0
        %v1662 = vand.u32 %v918, 4294901760
        %1663 = vmatmul.mubr.f32.gmra.mrb[0].mxu0 %v1662
        %v1664 = vpop.f32.mrb[0].mxu0
        %v1665 = vadd.f32 %v1550, %v1664
        %v1666 = vpop.f32.mrb[0].mxu0
        %1667 = vmatprep.mubr.f32.mxu0 0.0
        %v1668 = vand.u32 %v921, 4294901760
        %1669 = vmatmul.mubr.f32.gmra.mrb[0].mxu0 %v1668
        %v1670 = vpop.f32.mrb[0].mxu0
        %v1671 = vadd.f32 %v1556, %v1670
        %v1672 = vpop.f32.mrb[0].mxu0
        %1673 = vmatprep.mubr.f32.mxu0 0.0
        %v1674 = vand.u32 %v924, 4294901760
        %1675 = vmatmul.mubr.f32.gmra.mrb[0].mxu0 %v1674
        %v1676 = vpop.f32.mrb[0].mxu0
        %v1677 = vadd.f32 %v1562, %v1676
        %v1678 = vpop.f32.mrb[0].mxu0
        %1679 = vmatprep.mubr.f32.mxu0 0.0
        %v1680 = vand.u32 %v927, 4294901760
        %1681 = vmatmul.mubr.f32.gmra.mrb[0].mxu0 %v1680
        %v1682 = vpop.f32.mrb[0].mxu0
        %v1683 = vadd.f32 %v1568, %v1682
        %v1684 = vpop.f32.mrb[0].mxu0
        %1685 = vmatprep.mubr.f32.mxu0 0.0
        %v1686 = vand.u32 %v930, 4294901760
        %1687 = vmatmul.mubr.f32.gmra.mrb[0].mxu0 %v1686
        %v1688 = vpop.f32.mrb[0].mxu0
        %v1689 = vadd.f32 %v1574, %v1688
        %v1690 = vpop.f32.mrb[0].mxu0
        %1691 = vdwg.mxu0
        %1694 = vrot.lane.b32.xlu0 %v286, 32
        %v1695 = vpop.permute.xlu0 %1694
        %1696 = vrot.lane.b32.xlu0 %v287, 32
        %v1697 = vpop.permute.xlu0 %1696
        %vm1700 = vcmask 261120
        %v1701 = vsel %vm1700, 0.0, %v1695
        %v1702 = vsel %vm1700, 0.0, %v1697
        %v1703 = vsub.f32 %v1647, %v1701
        %v1704 = vsub.f32 %v1653, %v1702
        %v1705 = vsub.f32 %v1659, %v1701
        %v1706 = vsub.f32 %v1665, %v1702
        %v1707 = vsub.f32 %v1671, %v1701
        %v1708 = vsub.f32 %v1677, %v1702
        %v1709 = vsub.f32 %v1683, %v1701
        %v1710 = vsub.f32 %v1689, %v1702
        %1713 = vrot.lane.b32.xlu0 %v1705, 35
        %v1714 = vpop.permute.xlu0 %1713
        %1715 = vrot.lane.b32.xlu0 %v1706, 35
        %v1716 = vpop.permute.xlu0 %1715
        %1721 = vrot.lane.b32.xlu0 %v1707, 70
        %v1722 = vpop.permute.xlu0 %1721
        %1723 = vrot.lane.b32.xlu0 %v1708, 70
        %v1724 = vpop.permute.xlu0 %1723
        %1729 = vrot.lane.b32.xlu0 %v1709, 105
        %v1730 = vpop.permute.xlu0 %1729
        %1731 = vrot.lane.b32.xlu0 %v1710, 105
        %v1732 = vpop.permute.xlu0 %1731
        %vm1735 = vcmask 285696
        %v1736 = vsel %vm1735, %v1703, %v1714
        %v1737 = vsel %vm1735, %v1704, %v1716
        %vm1738 = vcmask 572416
        %v1739 = vsel %vm1738, %v1736, %v1722
        %v1740 = vsel %vm1738, %v1737, %v1724
        %vm1741 = vcmask 859136
        %v1742 = vsel %vm1741, %v1739, %v1730
        %v1743 = vsel %vm1741, %v1740, %v1732
        %1744 = vst [vmem:[%s283] sm:$0xff] %v1742
        %vm1745 = vcmask 97280
        %1746 = vst.msk [vmem:[%s283 + $0x8] sm:$0xff] %vm1745, %v1730
        %1747 = vst [vmem:[%s283 + $0x10] sm:$0xff] %v1743
        %1748 = vst.msk [vmem:[%s283 + $0x18] sm:$0xff] %vm1745, %v1732
        %s1749 = sand.u32 %s125, 1
        %s1750 = scalar_lea.sflag [#allocation4], %s1749
        %s1751 = sand.u32 %s125, 1
        %s1752 = smul.addr %s1751, 32
        %s1753 = scalar_lea.vmem [#allocation8], %s1752
        // Predicated region
        $region45: #{tpu_custom_call.1} parent=31 // pred_check
          %p1754 = pneg %p135
        $region46: #{tpu_custom_call.1} parent=31 // pred_check_branch
          %1756 = sbr.rel (%p1754) target = $region48
        $region47: #{tpu_custom_call.1} parent=31 // pred_region
          %s1757 = smul.u32 2, %s28
          %s1759 = ssub.s32 512, 512
          %1760 = vsyncadd %s1750, %s1759
          %s1761 = smul.addr %s1757, 2
          %s1762 = smul.addr %s27, 4
          %s1763 = sadd.s32 %s1761, %s1762
          %s1764 = smul.addr %s1763, 128
          %s1765 = scalar_lea.hbm %s3, %s1764
          %s1766 = sshll.u32 %s1753, 4
          %s1767 = int_to_ptr.vmem [resolvable:$true] %s1766
          %1772 = dma.vmem_to_hbm [thread:$0]  %s1767, 512, %s1765, %s1750, 256, 256, 16
        $region48: #{tpu_custom_call.1} parent=31 // pred_fallthru
          _
      $region32: #{tpu_custom_call.1} parent=5 // pred_fallthru
        _
      %p1773 = scmp.le.s32.totalorder 2, %s18
      // Predicated region
      $region49: #{tpu_custom_call.1} parent=5 // pred_check
        %p1774 = pneg %p1773
      $region50: #{tpu_custom_call.1} parent=5 // pred_check_branch
        %1776 = sbr.rel (%p1774) target = $region52
      $region51: #{tpu_custom_call.1} parent=5 // pred_region
        %s1777 = ssub.s32 %s18, 2
        // Predicated region
        $region53: #{tpu_custom_call.1} parent=51 // pred_check
          %p1778 = pneg %p141
        $region54: #{tpu_custom_call.1} parent=51 // pred_check_branch
          %1780 = sbr.rel (%p1778) target = $region56
        $region55: #{tpu_custom_call.1} parent=51 // pred_region
          %s1781 = sand.u32 %s126, 1
          %s1782 = scalar_lea.sflag [#allocation4], %s1781
          %s1783 = sand.u32 %s126, 1
          %s1784 = smul.addr %s1783, 32
          %s1785 = scalar_lea.vmem [#allocation8], %s1784
          %1786 = dma.done %s1782, 512
        $region56: #{tpu_custom_call.1} parent=51 // pred_fallthru
          _
      $region52: #{tpu_custom_call.1} parent=5 // pred_fallthru
        _
    $region6: #{tpu_custom_call.1} parent=1 // loop_footer
      %s22 = sadd.s32 1, %s18
    $region7: #{tpu_custom_call.1} parent=1 // loop_footer_branch
      %17 = sbr.rel target = $region3
    $region8: #{tpu_custom_call.1} parent=1 // loop_exit
      _
    %1787 = vsyncpa [#allocation3], 1
    %s1788 = scalar_lea.sflag [#allocation3], 1
    %1789 = vsyncpa %s1788, 1
    %1790 = vsyncpa [#allocation6], 1
    %s1791 = scalar_lea.sflag [#allocation6], 1
    %1792 = vsyncpa %s1791, 1
    %1793 = vsyncpa [#allocation4], 1
    %s1794 = scalar_lea.sflag [#allocation4], 1
    %1795 = vsyncpa %s1794, 1

</llo_original>
